<compile_context>
chip_gen: v6e
topology: v6e:2x2x1
jax: 0.10.0
libtpu: 0.0.40
codegen_flags: <defaults>
</compile_context>

<pallas_src>
import jax
import jax.numpy as jnp
from jax.experimental import pallas as pl
from jax.experimental.pallas import tpu as pltpu

LEAKY_SLOPE = 0.2
BN_EPS = 1e-5
# MXU operand dtype: keep f32 for exact parity at toy sizes; switch to
# jnp.bfloat16 on v6e/v7x for production shapes (accumulation stays f32).
MXU_DTYPE = jnp.float32


# ----------------------------- fused kernel --------------------------------
def _fcved_kernel(
        x_ref, eps_ref,
        e1_w, e1_b, e1_g, e1_be,
        e2_w, e2_b, e2_g, e2_be,
        e3_w, e3_b, e3_g, e3_be,
        mu_w, mu_b,
        lv_w, lv_b,
        d1_w, d1_b, d1_g, d1_be,
        d2_w, d2_b, d2_g, d2_be,
        d3_w, d3_b, d3_g, d3_be,
        o_w, o_b,
        z_ref, recon_ref, mean_ref, logvar_ref):
    """Entire FcVed forward in one VMEM-resident kernel invocation."""

    def linear(h, w_ref, b_ref):
        # Single MXU matmul with f32 accumulation; bias is a (1, D) row that
        # broadcasts once per layer.
        acc = jnp.dot(h.astype(MXU_DTYPE), w_ref[...].astype(MXU_DTYPE),
                      preferred_element_type=jnp.float32)
        return acc + b_ref[...].astype(jnp.float32)

    def bn_leaky(h, g_ref, be_ref):
        # Training-mode BatchNorm1d on (N, C): per-feature stats over the batch
        # dim, biased variance, eps=1e-5; fused LeakyReLU(0.2).  All f32.
        mu = jnp.mean(h, axis=0, keepdims=True)
        var = jnp.mean(jnp.square(h - mu), axis=0, keepdims=True)
        h = (h - mu) * jax.lax.rsqrt(var + BN_EPS)
        h = h * g_ref[...].astype(jnp.float32) + be_ref[...].astype(jnp.float32)
        return jnp.where(h >= 0, h, LEAKY_SLOPE * h)

    # ------------------------------ encoder ---------------------------------
    h = x_ref[...].astype(jnp.float32)
    h = bn_leaky(linear(h, e1_w, e1_b), e1_g, e1_be)   # encode_fc_1
    h = bn_leaky(linear(h, e2_w, e2_b), e2_g, e2_be)   # encode_fc_2
    h = bn_leaky(linear(h, e3_w, e3_b), e3_g, e3_be)   # encode_fc_3

    mean = linear(h, mu_w, mu_b)                       # encode_fc_mean
    log_var = linear(h, lv_w, lv_b)                    # encode_fc_log_var

    # -------------------- reparameterize: z = eps*std + mean ----------------
    z = eps_ref[...].astype(jnp.float32) * jnp.exp(0.5 * log_var) + mean

    # ------------------------------ decoder ---------------------------------
    d = bn_leaky(linear(z, d1_w, d1_b), d1_g, d1_be)   # decode_fc_z
    d = bn_leaky(linear(d, d2_w, d2_b), d2_g, d2_be)   # decode_fc_2
    d = bn_leaky(linear(d, d3_w, d3_b), d3_g, d3_be)   # decode_fc_3
    recon = linear(d, o_w, o_b)                        # decode_fc_4

    z_ref[...] = z.astype(z_ref.dtype)
    recon_ref[...] = recon.astype(recon_ref.dtype)
    mean_ref[...] = mean.astype(mean_ref.dtype)
    logvar_ref[...] = log_var.astype(logvar_ref.dtype)


# ------------------------------- wrapper ------------------------------------
def fc_ved_forward(params, x, eps):
    """params: dict from init_params; x: (N, input_dim); eps: (N, latent_dim).

    Returns (z, recon_x, mean, log_var) — same as FcVed.forward.
    """
    N = x.shape[0]
    latent_dim = params['mean'][0].shape[1]
    output_dim = params['out'][0].shape[1]

    flat_inputs = [x, eps]
    for name in ('enc1', 'enc2', 'enc3', 'mean', 'log_var',
                 'dec1', 'dec2', 'dec3', 'out'):
        flat_inputs.extend(params[name])

    out_shape = (
        jax.ShapeDtypeStruct((N, latent_dim), jnp.float32),   # z
        jax.ShapeDtypeStruct((N, output_dim), jnp.float32),   # recon_x
        jax.ShapeDtypeStruct((N, latent_dim), jnp.float32),   # mean
        jax.ShapeDtypeStruct((N, latent_dim), jnp.float32),   # log_var
    )
    return pl.pallas_call(
        _fcved_kernel,
        out_shape=out_shape,
        # Whole-array blocks, explicitly pinned to VMEM (single grid step).
        in_specs=[pl.BlockSpec(memory_space=pltpu.MemorySpace.VMEM)
                  for _ in flat_inputs],
        out_specs=tuple(pl.BlockSpec(memory_space=pltpu.MemorySpace.VMEM)
                        for _ in out_shape),
    )(*flat_inputs)


# ------------------------------ parameters ----------------------------------
def init_params(key, input_dim, output_dim, *, dim_1B, dim_2B, dim_3B,
                dim_1A, dim_2A, dim_3A, latent_dim):
    keys = jax.random.split(key, 9)

    def linear_init(k, din, dout):
        bound = 1.0 / (din ** 0.5)            # PyTorch nn.Linear default bound
        kw, kb = jax.random.split(k)
        w = jax.random.uniform(kw, (din, dout), jnp.float32, -bound, bound)
        b = jax.random.uniform(kb, (1, dout), jnp.float32, -bound, bound)
        return w, b

    def bn_init(dout):
        return (jnp.ones((1, dout), jnp.float32),    # gamma (PyTorch default)
                jnp.zeros((1, dout), jnp.float32))   # beta

    p = {}
    enc_dims = [(input_dim, dim_1B), (dim_1B, dim_2B), (dim_2B, dim_3B)]
    for i, (din, dout) in enumerate(enc_dims, 1):
        w, b = linear_init(keys[i - 1], din, dout)
        g, be = bn_init(dout)
        p[f'enc{i}'] = (w, b, g, be)

    p['mean'] = linear_init(keys[3], dim_3B, latent_dim)
    p['log_var'] = linear_init(keys[4], dim_3B, latent_dim)

    dec_dims = [(latent_dim, dim_3A), (dim_3A, dim_2A), (dim_2A, dim_1A)]
    for i, (din, dout) in enumerate(dec_dims, 1):
        w, b = linear_init(keys[4 + i], din, dout)
        g, be = bn_init(dout)
        p[f'dec{i}'] = (w, b, g, be)

    p['out'] = linear_init(keys[8], dim_1A, output_dim)
    return p


# --------------------------------- main --------------------------------------
if __name__ == "__main__":
    key = jax.random.PRNGKey(0)
    kx, keps, kp = jax.random.split(key, 3)

    # Small shapes consistent with the module (scaled-down FcVed dims).
    N = 8
    input_dim, output_dim = 64, 48
    dims = dict(dim_1B=64, dim_2B=48, dim_3B=32,
                dim_1A=64, dim_2A=48, dim_3A=32, latent_dim=16)

    params = init_params(kp, input_dim, output_dim, **dims)
    x = jax.random.normal(kx, (N, input_dim), jnp.float32)
    # Reparameterization noise (torch.randn_like) as a deterministic input.
    eps = jax.random.normal(keps, (N, dims['latent_dim']), jnp.float32)

    z, recon_x, mean, log_var = jax.block_until_ready(
        fc_ved_forward(params, x, eps))

    assert z.shape == (N, dims['latent_dim']), z.shape
    assert recon_x.shape == (N, output_dim), recon_x.shape
    assert mean.shape == (N, dims['latent_dim']), mean.shape
    assert log_var.shape == (N, dims['latent_dim']), log_var.shape
    for t in (z, recon_x, mean, log_var):
        assert bool(jnp.all(jnp.isfinite(t)))
    print("KERNEL_OK")
</pallas_src>

<mosaic_0001>
module attributes {stable_mosaic.version = 11 : i64} {
  func.func @_fcved_kernel(%arg0: memref<8x64xf32, #tpu.memory_space<vmem>>, %arg1: memref<8x16xf32, #tpu.memory_space<vmem>>, %arg2: memref<64x64xf32, #tpu.memory_space<vmem>>, %arg3: memref<1x64xf32, #tpu.memory_space<vmem>>, %arg4: memref<1x64xf32, #tpu.memory_space<vmem>>, %arg5: memref<1x64xf32, #tpu.memory_space<vmem>>, %arg6: memref<64x48xf32, #tpu.memory_space<vmem>>, %arg7: memref<1x48xf32, #tpu.memory_space<vmem>>, %arg8: memref<1x48xf32, #tpu.memory_space<vmem>>, %arg9: memref<1x48xf32, #tpu.memory_space<vmem>>, %arg10: memref<48x32xf32, #tpu.memory_space<vmem>>, %arg11: memref<1x32xf32, #tpu.memory_space<vmem>>, %arg12: memref<1x32xf32, #tpu.memory_space<vmem>>, %arg13: memref<1x32xf32, #tpu.memory_space<vmem>>, %arg14: memref<32x16xf32, #tpu.memory_space<vmem>>, %arg15: memref<1x16xf32, #tpu.memory_space<vmem>>, %arg16: memref<32x16xf32, #tpu.memory_space<vmem>>, %arg17: memref<1x16xf32, #tpu.memory_space<vmem>>, %arg18: memref<16x32xf32, #tpu.memory_space<vmem>>, %arg19: memref<1x32xf32, #tpu.memory_space<vmem>>, %arg20: memref<1x32xf32, #tpu.memory_space<vmem>>, %arg21: memref<1x32xf32, #tpu.memory_space<vmem>>, %arg22: memref<32x48xf32, #tpu.memory_space<vmem>>, %arg23: memref<1x48xf32, #tpu.memory_space<vmem>>, %arg24: memref<1x48xf32, #tpu.memory_space<vmem>>, %arg25: memref<1x48xf32, #tpu.memory_space<vmem>>, %arg26: memref<48x64xf32, #tpu.memory_space<vmem>>, %arg27: memref<1x64xf32, #tpu.memory_space<vmem>>, %arg28: memref<1x64xf32, #tpu.memory_space<vmem>>, %arg29: memref<1x64xf32, #tpu.memory_space<vmem>>, %arg30: memref<64x48xf32, #tpu.memory_space<vmem>>, %arg31: memref<1x48xf32, #tpu.memory_space<vmem>>, %arg32: memref<8x16xf32, #tpu.memory_space<vmem>>, %arg33: memref<8x48xf32, #tpu.memory_space<vmem>>, %arg34: memref<8x16xf32, #tpu.memory_space<vmem>>, %arg35: memref<8x16xf32, #tpu.memory_space<vmem>>) attributes {dimension_semantics = [], scalar_prefetch = 0 : i64, scratch_operands = 0 : i64, tpu.core_type = #tpu.core_type<tc>} {
    %c0 = arith.constant 0 : index
    %c0_0 = arith.constant 0 : index
    %0 = vector.load %arg0[%c0, %c0_0] : memref<8x64xf32, #tpu.memory_space<vmem>>, vector<8x64xf32>
    %c0_1 = arith.constant 0 : index
    %c0_2 = arith.constant 0 : index
    %1 = vector.load %arg2[%c0_1, %c0_2] : memref<64x64xf32, #tpu.memory_space<vmem>>, vector<64x64xf32>
    %cst = arith.constant dense<0.000000e+00> : vector<8x64xf32>
    %2 = tpu.matmul %0, %1, %cst {dimension_numbers = #tpu.dot_dimension_numbers<[1], [0], [0], [1], [0, 0, 1, 1], [], []>} : vector<8x64xf32>, vector<64x64xf32>, vector<8x64xf32> -> vector<8x64xf32>
    %c0_3 = arith.constant 0 : index
    %c0_4 = arith.constant 0 : index
    %3 = vector.load %arg3[%c0_3, %c0_4] : memref<1x64xf32, #tpu.memory_space<vmem>>, vector<1x64xf32>
    %4 = vector.broadcast %3 : vector<1x64xf32> to vector<8x64xf32>
    %5 = arith.addf %2, %4 : vector<8x64xf32>
    %cst_5 = arith.constant dense<0.000000e+00> : vector<64xf32>
    %6 = vector.multi_reduction <add>, %5, %cst_5 [0] : vector<8x64xf32> to vector<64xf32>
    %7 = vector.shape_cast %6 : vector<64xf32> to vector<1x64xf32>
    %cst_6 = arith.constant 8.000000e+00 : f32
    %8 = vector.broadcast %cst_6 : f32 to vector<1x64xf32>
    %9 = arith.divf %7, %8 : vector<1x64xf32>
    %10 = vector.broadcast %9 : vector<1x64xf32> to vector<8x64xf32>
    %11 = arith.subf %5, %10 : vector<8x64xf32>
    %12 = arith.mulf %11, %11 : vector<8x64xf32>
    %cst_7 = arith.constant dense<0.000000e+00> : vector<64xf32>
    %13 = vector.multi_reduction <add>, %12, %cst_7 [0] : vector<8x64xf32> to vector<64xf32>
    %14 = vector.shape_cast %13 : vector<64xf32> to vector<1x64xf32>
    %cst_8 = arith.constant 8.000000e+00 : f32
    %15 = vector.broadcast %cst_8 : f32 to vector<1x64xf32>
    %16 = arith.divf %14, %15 : vector<1x64xf32>
    %17 = vector.broadcast %9 : vector<1x64xf32> to vector<8x64xf32>
    %18 = arith.subf %5, %17 : vector<8x64xf32>
    %cst_9 = arith.constant 9.99999974E-6 : f32
    %19 = vector.broadcast %cst_9 : f32 to vector<1x64xf32>
    %20 = arith.addf %16, %19 : vector<1x64xf32>
    %21 = math.rsqrt %20 : vector<1x64xf32>
    %22 = vector.broadcast %21 : vector<1x64xf32> to vector<8x64xf32>
    %23 = arith.mulf %18, %22 : vector<8x64xf32>
    %c0_10 = arith.constant 0 : index
    %c0_11 = arith.constant 0 : index
    %24 = vector.load %arg4[%c0_10, %c0_11] : memref<1x64xf32, #tpu.memory_space<vmem>>, vector<1x64xf32>
    %25 = vector.broadcast %24 : vector<1x64xf32> to vector<8x64xf32>
    %26 = arith.mulf %23, %25 : vector<8x64xf32>
    %c0_12 = arith.constant 0 : index
    %c0_13 = arith.constant 0 : index
    %27 = vector.load %arg5[%c0_12, %c0_13] : memref<1x64xf32, #tpu.memory_space<vmem>>, vector<1x64xf32>
    %28 = vector.broadcast %27 : vector<1x64xf32> to vector<8x64xf32>
    %29 = arith.addf %26, %28 : vector<8x64xf32>
    %cst_14 = arith.constant 0.000000e+00 : f32
    %30 = vector.broadcast %cst_14 : f32 to vector<8x64xf32>
    %31 = arith.cmpf oge, %29, %30 : vector<8x64xf32>
    %cst_15 = arith.constant 2.000000e-01 : f32
    %32 = vector.broadcast %cst_15 : f32 to vector<8x64xf32>
    %33 = arith.mulf %32, %29 : vector<8x64xf32>
    %34 = arith.select %31, %29, %33 : vector<8x64xi1>, vector<8x64xf32>
    %c0_16 = arith.constant 0 : index
    %c0_17 = arith.constant 0 : index
    %35 = vector.load %arg6[%c0_16, %c0_17] : memref<64x48xf32, #tpu.memory_space<vmem>>, vector<64x48xf32>
    %cst_18 = arith.constant dense<0.000000e+00> : vector<8x48xf32>
    %36 = tpu.matmul %34, %35, %cst_18 {dimension_numbers = #tpu.dot_dimension_numbers<[1], [0], [0], [1], [0, 0, 1, 1], [], []>} : vector<8x64xf32>, vector<64x48xf32>, vector<8x48xf32> -> vector<8x48xf32>
    %c0_19 = arith.constant 0 : index
    %c0_20 = arith.constant 0 : index
    %37 = vector.load %arg7[%c0_19, %c0_20] : memref<1x48xf32, #tpu.memory_space<vmem>>, vector<1x48xf32>
    %38 = vector.broadcast %37 : vector<1x48xf32> to vector<8x48xf32>
    %39 = arith.addf %36, %38 : vector<8x48xf32>
    %cst_21 = arith.constant dense<0.000000e+00> : vector<48xf32>
    %40 = vector.multi_reduction <add>, %39, %cst_21 [0] : vector<8x48xf32> to vector<48xf32>
    %41 = vector.shape_cast %40 : vector<48xf32> to vector<1x48xf32>
    %cst_22 = arith.constant 8.000000e+00 : f32
    %42 = vector.broadcast %cst_22 : f32 to vector<1x48xf32>
    %43 = arith.divf %41, %42 : vector<1x48xf32>
    %44 = vector.broadcast %43 : vector<1x48xf32> to vector<8x48xf32>
    %45 = arith.subf %39, %44 : vector<8x48xf32>
    %46 = arith.mulf %45, %45 : vector<8x48xf32>
    %cst_23 = arith.constant dense<0.000000e+00> : vector<48xf32>
    %47 = vector.multi_reduction <add>, %46, %cst_23 [0] : vector<8x48xf32> to vector<48xf32>
    %48 = vector.shape_cast %47 : vector<48xf32> to vector<1x48xf32>
    %cst_24 = arith.constant 8.000000e+00 : f32
    %49 = vector.broadcast %cst_24 : f32 to vector<1x48xf32>
    %50 = arith.divf %48, %49 : vector<1x48xf32>
    %51 = vector.broadcast %43 : vector<1x48xf32> to vector<8x48xf32>
    %52 = arith.subf %39, %51 : vector<8x48xf32>
    %cst_25 = arith.constant 9.99999974E-6 : f32
    %53 = vector.broadcast %cst_25 : f32 to vector<1x48xf32>
    %54 = arith.addf %50, %53 : vector<1x48xf32>
    %55 = math.rsqrt %54 : vector<1x48xf32>
    %56 = vector.broadcast %55 : vector<1x48xf32> to vector<8x48xf32>
    %57 = arith.mulf %52, %56 : vector<8x48xf32>
    %c0_26 = arith.constant 0 : index
    %c0_27 = arith.constant 0 : index
    %58 = vector.load %arg8[%c0_26, %c0_27] : memref<1x48xf32, #tpu.memory_space<vmem>>, vector<1x48xf32>
    %59 = vector.broadcast %58 : vector<1x48xf32> to vector<8x48xf32>
    %60 = arith.mulf %57, %59 : vector<8x48xf32>
    %c0_28 = arith.constant 0 : index
    %c0_29 = arith.constant 0 : index
    %61 = vector.load %arg9[%c0_28, %c0_29] : memref<1x48xf32, #tpu.memory_space<vmem>>, vector<1x48xf32>
    %62 = vector.broadcast %61 : vector<1x48xf32> to vector<8x48xf32>
    %63 = arith.addf %60, %62 : vector<8x48xf32>
    %cst_30 = arith.constant 0.000000e+00 : f32
    %64 = vector.broadcast %cst_30 : f32 to vector<8x48xf32>
    %65 = arith.cmpf oge, %63, %64 : vector<8x48xf32>
    %cst_31 = arith.constant 2.000000e-01 : f32
    %66 = vector.broadcast %cst_31 : f32 to vector<8x48xf32>
    %67 = arith.mulf %66, %63 : vector<8x48xf32>
    %68 = arith.select %65, %63, %67 : vector<8x48xi1>, vector<8x48xf32>
    %c0_32 = arith.constant 0 : index
    %c0_33 = arith.constant 0 : index
    %69 = vector.load %arg10[%c0_32, %c0_33] : memref<48x32xf32, #tpu.memory_space<vmem>>, vector<48x32xf32>
    %cst_34 = arith.constant dense<0.000000e+00> : vector<8x32xf32>
    %70 = tpu.matmul %68, %69, %cst_34 {dimension_numbers = #tpu.dot_dimension_numbers<[1], [0], [0], [1], [0, 0, 1, 1], [], []>} : vector<8x48xf32>, vector<48x32xf32>, vector<8x32xf32> -> vector<8x32xf32>
    %c0_35 = arith.constant 0 : index
    %c0_36 = arith.constant 0 : index
    %71 = vector.load %arg11[%c0_35, %c0_36] : memref<1x32xf32, #tpu.memory_space<vmem>>, vector<1x32xf32>
    %72 = vector.broadcast %71 : vector<1x32xf32> to vector<8x32xf32>
    %73 = arith.addf %70, %72 : vector<8x32xf32>
    %cst_37 = arith.constant dense<0.000000e+00> : vector<32xf32>
    %74 = vector.multi_reduction <add>, %73, %cst_37 [0] : vector<8x32xf32> to vector<32xf32>
    %75 = vector.shape_cast %74 : vector<32xf32> to vector<1x32xf32>
    %cst_38 = arith.constant 8.000000e+00 : f32
    %76 = vector.broadcast %cst_38 : f32 to vector<1x32xf32>
    %77 = arith.divf %75, %76 : vector<1x32xf32>
    %78 = vector.broadcast %77 : vector<1x32xf32> to vector<8x32xf32>
    %79 = arith.subf %73, %78 : vector<8x32xf32>
    %80 = arith.mulf %79, %79 : vector<8x32xf32>
    %cst_39 = arith.constant dense<0.000000e+00> : vector<32xf32>
    %81 = vector.multi_reduction <add>, %80, %cst_39 [0] : vector<8x32xf32> to vector<32xf32>
    %82 = vector.shape_cast %81 : vector<32xf32> to vector<1x32xf32>
    %cst_40 = arith.constant 8.000000e+00 : f32
    %83 = vector.broadcast %cst_40 : f32 to vector<1x32xf32>
    %84 = arith.divf %82, %83 : vector<1x32xf32>
    %85 = vector.broadcast %77 : vector<1x32xf32> to vector<8x32xf32>
    %86 = arith.subf %73, %85 : vector<8x32xf32>
    %cst_41 = arith.constant 9.99999974E-6 : f32
    %87 = vector.broadcast %cst_41 : f32 to vector<1x32xf32>
    %88 = arith.addf %84, %87 : vector<1x32xf32>
    %89 = math.rsqrt %88 : vector<1x32xf32>
    %90 = vector.broadcast %89 : vector<1x32xf32> to vector<8x32xf32>
    %91 = arith.mulf %86, %90 : vector<8x32xf32>
    %c0_42 = arith.constant 0 : index
    %c0_43 = arith.constant 0 : index
    %92 = vector.load %arg12[%c0_42, %c0_43] : memref<1x32xf32, #tpu.memory_space<vmem>>, vector<1x32xf32>
    %93 = vector.broadcast %92 : vector<1x32xf32> to vector<8x32xf32>
    %94 = arith.mulf %91, %93 : vector<8x32xf32>
    %c0_44 = arith.constant 0 : index
    %c0_45 = arith.constant 0 : index
    %95 = vector.load %arg13[%c0_44, %c0_45] : memref<1x32xf32, #tpu.memory_space<vmem>>, vector<1x32xf32>
    %96 = vector.broadcast %95 : vector<1x32xf32> to vector<8x32xf32>
    %97 = arith.addf %94, %96 : vector<8x32xf32>
    %cst_46 = arith.constant 0.000000e+00 : f32
    %98 = vector.broadcast %cst_46 : f32 to vector<8x32xf32>
    %99 = arith.cmpf oge, %97, %98 : vector<8x32xf32>
    %cst_47 = arith.constant 2.000000e-01 : f32
    %100 = vector.broadcast %cst_47 : f32 to vector<8x32xf32>
    %101 = arith.mulf %100, %97 : vector<8x32xf32>
    %102 = arith.select %99, %97, %101 : vector<8x32xi1>, vector<8x32xf32>
    %c0_48 = arith.constant 0 : index
    %c0_49 = arith.constant 0 : index
    %103 = vector.load %arg14[%c0_48, %c0_49] : memref<32x16xf32, #tpu.memory_space<vmem>>, vector<32x16xf32>
    %cst_50 = arith.constant dense<0.000000e+00> : vector<8x16xf32>
    %104 = tpu.matmul %102, %103, %cst_50 {dimension_numbers = #tpu.dot_dimension_numbers<[1], [0], [0], [1], [0, 0, 1, 1], [], []>} : vector<8x32xf32>, vector<32x16xf32>, vector<8x16xf32> -> vector<8x16xf32>
    %c0_51 = arith.constant 0 : index
    %c0_52 = arith.constant 0 : index
    %105 = vector.load %arg15[%c0_51, %c0_52] : memref<1x16xf32, #tpu.memory_space<vmem>>, vector<1x16xf32>
    %106 = vector.broadcast %105 : vector<1x16xf32> to vector<8x16xf32>
    %107 = arith.addf %104, %106 : vector<8x16xf32>
    %c0_53 = arith.constant 0 : index
    %c0_54 = arith.constant 0 : index
    %108 = vector.load %arg16[%c0_53, %c0_54] : memref<32x16xf32, #tpu.memory_space<vmem>>, vector<32x16xf32>
    %cst_55 = arith.constant dense<0.000000e+00> : vector<8x16xf32>
    %109 = tpu.matmul %102, %108, %cst_55 {dimension_numbers = #tpu.dot_dimension_numbers<[1], [0], [0], [1], [0, 0, 1, 1], [], []>} : vector<8x32xf32>, vector<32x16xf32>, vector<8x16xf32> -> vector<8x16xf32>
    %c0_56 = arith.constant 0 : index
    %c0_57 = arith.constant 0 : index
    %110 = vector.load %arg17[%c0_56, %c0_57] : memref<1x16xf32, #tpu.memory_space<vmem>>, vector<1x16xf32>
    %111 = vector.broadcast %110 : vector<1x16xf32> to vector<8x16xf32>
    %112 = arith.addf %109, %111 : vector<8x16xf32>
    %c0_58 = arith.constant 0 : index
    %c0_59 = arith.constant 0 : index
    %113 = vector.load %arg1[%c0_58, %c0_59] : memref<8x16xf32, #tpu.memory_space<vmem>>, vector<8x16xf32>
    %cst_60 = arith.constant 5.000000e-01 : f32
    %114 = vector.broadcast %cst_60 : f32 to vector<8x16xf32>
    %115 = arith.mulf %114, %112 : vector<8x16xf32>
    %116 = math.exp %115 : vector<8x16xf32>
    %117 = arith.mulf %113, %116 : vector<8x16xf32>
    %118 = arith.addf %117, %107 : vector<8x16xf32>
    %c0_61 = arith.constant 0 : index
    %c0_62 = arith.constant 0 : index
    %119 = vector.load %arg18[%c0_61, %c0_62] : memref<16x32xf32, #tpu.memory_space<vmem>>, vector<16x32xf32>
    %cst_63 = arith.constant dense<0.000000e+00> : vector<8x32xf32>
    %120 = tpu.matmul %118, %119, %cst_63 {dimension_numbers = #tpu.dot_dimension_numbers<[1], [0], [0], [1], [0, 0, 1, 1], [], []>} : vector<8x16xf32>, vector<16x32xf32>, vector<8x32xf32> -> vector<8x32xf32>
    %c0_64 = arith.constant 0 : index
    %c0_65 = arith.constant 0 : index
    %121 = vector.load %arg19[%c0_64, %c0_65] : memref<1x32xf32, #tpu.memory_space<vmem>>, vector<1x32xf32>
    %122 = vector.broadcast %121 : vector<1x32xf32> to vector<8x32xf32>
    %123 = arith.addf %120, %122 : vector<8x32xf32>
    %cst_66 = arith.constant dense<0.000000e+00> : vector<32xf32>
    %124 = vector.multi_reduction <add>, %123, %cst_66 [0] : vector<8x32xf32> to vector<32xf32>
    %125 = vector.shape_cast %124 : vector<32xf32> to vector<1x32xf32>
    %cst_67 = arith.constant 8.000000e+00 : f32
    %126 = vector.broadcast %cst_67 : f32 to vector<1x32xf32>
    %127 = arith.divf %125, %126 : vector<1x32xf32>
    %128 = vector.broadcast %127 : vector<1x32xf32> to vector<8x32xf32>
    %129 = arith.subf %123, %128 : vector<8x32xf32>
    %130 = arith.mulf %129, %129 : vector<8x32xf32>
    %cst_68 = arith.constant dense<0.000000e+00> : vector<32xf32>
    %131 = vector.multi_reduction <add>, %130, %cst_68 [0] : vector<8x32xf32> to vector<32xf32>
    %132 = vector.shape_cast %131 : vector<32xf32> to vector<1x32xf32>
    %cst_69 = arith.constant 8.000000e+00 : f32
    %133 = vector.broadcast %cst_69 : f32 to vector<1x32xf32>
    %134 = arith.divf %132, %133 : vector<1x32xf32>
    %135 = vector.broadcast %127 : vector<1x32xf32> to vector<8x32xf32>
    %136 = arith.subf %123, %135 : vector<8x32xf32>
    %cst_70 = arith.constant 9.99999974E-6 : f32
    %137 = vector.broadcast %cst_70 : f32 to vector<1x32xf32>
    %138 = arith.addf %134, %137 : vector<1x32xf32>
    %139 = math.rsqrt %138 : vector<1x32xf32>
    %140 = vector.broadcast %139 : vector<1x32xf32> to vector<8x32xf32>
    %141 = arith.mulf %136, %140 : vector<8x32xf32>
    %c0_71 = arith.constant 0 : index
    %c0_72 = arith.constant 0 : index
    %142 = vector.load %arg20[%c0_71, %c0_72] : memref<1x32xf32, #tpu.memory_space<vmem>>, vector<1x32xf32>
    %143 = vector.broadcast %142 : vector<1x32xf32> to vector<8x32xf32>
    %144 = arith.mulf %141, %143 : vector<8x32xf32>
    %c0_73 = arith.constant 0 : index
    %c0_74 = arith.constant 0 : index
    %145 = vector.load %arg21[%c0_73, %c0_74] : memref<1x32xf32, #tpu.memory_space<vmem>>, vector<1x32xf32>
    %146 = vector.broadcast %145 : vector<1x32xf32> to vector<8x32xf32>
    %147 = arith.addf %144, %146 : vector<8x32xf32>
    %cst_75 = arith.constant 0.000000e+00 : f32
    %148 = vector.broadcast %cst_75 : f32 to vector<8x32xf32>
    %149 = arith.cmpf oge, %147, %148 : vector<8x32xf32>
    %cst_76 = arith.constant 2.000000e-01 : f32
    %150 = vector.broadcast %cst_76 : f32 to vector<8x32xf32>
    %151 = arith.mulf %150, %147 : vector<8x32xf32>
    %152 = arith.select %149, %147, %151 : vector<8x32xi1>, vector<8x32xf32>
    %c0_77 = arith.constant 0 : index
    %c0_78 = arith.constant 0 : index
    %153 = vector.load %arg22[%c0_77, %c0_78] : memref<32x48xf32, #tpu.memory_space<vmem>>, vector<32x48xf32>
    %cst_79 = arith.constant dense<0.000000e+00> : vector<8x48xf32>
    %154 = tpu.matmul %152, %153, %cst_79 {dimension_numbers = #tpu.dot_dimension_numbers<[1], [0], [0], [1], [0, 0, 1, 1], [], []>} : vector<8x32xf32>, vector<32x48xf32>, vector<8x48xf32> -> vector<8x48xf32>
    %c0_80 = arith.constant 0 : index
    %c0_81 = arith.constant 0 : index
    %155 = vector.load %arg23[%c0_80, %c0_81] : memref<1x48xf32, #tpu.memory_space<vmem>>, vector<1x48xf32>
    %156 = vector.broadcast %155 : vector<1x48xf32> to vector<8x48xf32>
    %157 = arith.addf %154, %156 : vector<8x48xf32>
    %cst_82 = arith.constant dense<0.000000e+00> : vector<48xf32>
    %158 = vector.multi_reduction <add>, %157, %cst_82 [0] : vector<8x48xf32> to vector<48xf32>
    %159 = vector.shape_cast %158 : vector<48xf32> to vector<1x48xf32>
    %cst_83 = arith.constant 8.000000e+00 : f32
    %160 = vector.broadcast %cst_83 : f32 to vector<1x48xf32>
    %161 = arith.divf %159, %160 : vector<1x48xf32>
    %162 = vector.broadcast %161 : vector<1x48xf32> to vector<8x48xf32>
    %163 = arith.subf %157, %162 : vector<8x48xf32>
    %164 = arith.mulf %163, %163 : vector<8x48xf32>
    %cst_84 = arith.constant dense<0.000000e+00> : vector<48xf32>
    %165 = vector.multi_reduction <add>, %164, %cst_84 [0] : vector<8x48xf32> to vector<48xf32>
    %166 = vector.shape_cast %165 : vector<48xf32> to vector<1x48xf32>
    %cst_85 = arith.constant 8.000000e+00 : f32
    %167 = vector.broadcast %cst_85 : f32 to vector<1x48xf32>
    %168 = arith.divf %166, %167 : vector<1x48xf32>
    %169 = vector.broadcast %161 : vector<1x48xf32> to vector<8x48xf32>
    %170 = arith.subf %157, %169 : vector<8x48xf32>
    %cst_86 = arith.constant 9.99999974E-6 : f32
    %171 = vector.broadcast %cst_86 : f32 to vector<1x48xf32>
    %172 = arith.addf %168, %171 : vector<1x48xf32>
    %173 = math.rsqrt %172 : vector<1x48xf32>
    %174 = vector.broadcast %173 : vector<1x48xf32> to vector<8x48xf32>
    %175 = arith.mulf %170, %174 : vector<8x48xf32>
    %c0_87 = arith.constant 0 : index
    %c0_88 = arith.constant 0 : index
    %176 = vector.load %arg24[%c0_87, %c0_88] : memref<1x48xf32, #tpu.memory_space<vmem>>, vector<1x48xf32>
    %177 = vector.broadcast %176 : vector<1x48xf32> to vector<8x48xf32>
    %178 = arith.mulf %175, %177 : vector<8x48xf32>
    %c0_89 = arith.constant 0 : index
    %c0_90 = arith.constant 0 : index
    %179 = vector.load %arg25[%c0_89, %c0_90] : memref<1x48xf32, #tpu.memory_space<vmem>>, vector<1x48xf32>
    %180 = vector.broadcast %179 : vector<1x48xf32> to vector<8x48xf32>
    %181 = arith.addf %178, %180 : vector<8x48xf32>
    %cst_91 = arith.constant 0.000000e+00 : f32
    %182 = vector.broadcast %cst_91 : f32 to vector<8x48xf32>
    %183 = arith.cmpf oge, %181, %182 : vector<8x48xf32>
    %cst_92 = arith.constant 2.000000e-01 : f32
    %184 = vector.broadcast %cst_92 : f32 to vector<8x48xf32>
    %185 = arith.mulf %184, %181 : vector<8x48xf32>
    %186 = arith.select %183, %181, %185 : vector<8x48xi1>, vector<8x48xf32>
    %c0_93 = arith.constant 0 : index
    %c0_94 = arith.constant 0 : index
    %187 = vector.load %arg26[%c0_93, %c0_94] : memref<48x64xf32, #tpu.memory_space<vmem>>, vector<48x64xf32>
    %cst_95 = arith.constant dense<0.000000e+00> : vector<8x64xf32>
    %188 = tpu.matmul %186, %187, %cst_95 {dimension_numbers = #tpu.dot_dimension_numbers<[1], [0], [0], [1], [0, 0, 1, 1], [], []>} : vector<8x48xf32>, vector<48x64xf32>, vector<8x64xf32> -> vector<8x64xf32>
    %c0_96 = arith.constant 0 : index
    %c0_97 = arith.constant 0 : index
    %189 = vector.load %arg27[%c0_96, %c0_97] : memref<1x64xf32, #tpu.memory_space<vmem>>, vector<1x64xf32>
    %190 = vector.broadcast %189 : vector<1x64xf32> to vector<8x64xf32>
    %191 = arith.addf %188, %190 : vector<8x64xf32>
    %cst_98 = arith.constant dense<0.000000e+00> : vector<64xf32>
    %192 = vector.multi_reduction <add>, %191, %cst_98 [0] : vector<8x64xf32> to vector<64xf32>
    %193 = vector.shape_cast %192 : vector<64xf32> to vector<1x64xf32>
    %cst_99 = arith.constant 8.000000e+00 : f32
    %194 = vector.broadcast %cst_99 : f32 to vector<1x64xf32>
    %195 = arith.divf %193, %194 : vector<1x64xf32>
    %196 = vector.broadcast %195 : vector<1x64xf32> to vector<8x64xf32>
    %197 = arith.subf %191, %196 : vector<8x64xf32>
    %198 = arith.mulf %197, %197 : vector<8x64xf32>
    %cst_100 = arith.constant dense<0.000000e+00> : vector<64xf32>
    %199 = vector.multi_reduction <add>, %198, %cst_100 [0] : vector<8x64xf32> to vector<64xf32>
    %200 = vector.shape_cast %199 : vector<64xf32> to vector<1x64xf32>
    %cst_101 = arith.constant 8.000000e+00 : f32
    %201 = vector.broadcast %cst_101 : f32 to vector<1x64xf32>
    %202 = arith.divf %200, %201 : vector<1x64xf32>
    %203 = vector.broadcast %195 : vector<1x64xf32> to vector<8x64xf32>
    %204 = arith.subf %191, %203 : vector<8x64xf32>
    %cst_102 = arith.constant 9.99999974E-6 : f32
    %205 = vector.broadcast %cst_102 : f32 to vector<1x64xf32>
    %206 = arith.addf %202, %205 : vector<1x64xf32>
    %207 = math.rsqrt %206 : vector<1x64xf32>
    %208 = vector.broadcast %207 : vector<1x64xf32> to vector<8x64xf32>
    %209 = arith.mulf %204, %208 : vector<8x64xf32>
    %c0_103 = arith.constant 0 : index
    %c0_104 = arith.constant 0 : index
    %210 = vector.load %arg28[%c0_103, %c0_104] : memref<1x64xf32, #tpu.memory_space<vmem>>, vector<1x64xf32>
    %211 = vector.broadcast %210 : vector<1x64xf32> to vector<8x64xf32>
    %212 = arith.mulf %209, %211 : vector<8x64xf32>
    %c0_105 = arith.constant 0 : index
    %c0_106 = arith.constant 0 : index
    %213 = vector.load %arg29[%c0_105, %c0_106] : memref<1x64xf32, #tpu.memory_space<vmem>>, vector<1x64xf32>
    %214 = vector.broadcast %213 : vector<1x64xf32> to vector<8x64xf32>
    %215 = arith.addf %212, %214 : vector<8x64xf32>
    %cst_107 = arith.constant 0.000000e+00 : f32
    %216 = vector.broadcast %cst_107 : f32 to vector<8x64xf32>
    %217 = arith.cmpf oge, %215, %216 : vector<8x64xf32>
    %cst_108 = arith.constant 2.000000e-01 : f32
    %218 = vector.broadcast %cst_108 : f32 to vector<8x64xf32>
    %219 = arith.mulf %218, %215 : vector<8x64xf32>
    %220 = arith.select %217, %215, %219 : vector<8x64xi1>, vector<8x64xf32>
    %c0_109 = arith.constant 0 : index
    %c0_110 = arith.constant 0 : index
    %221 = vector.load %arg30[%c0_109, %c0_110] : memref<64x48xf32, #tpu.memory_space<vmem>>, vector<64x48xf32>
    %cst_111 = arith.constant dense<0.000000e+00> : vector<8x48xf32>
    %222 = tpu.matmul %220, %221, %cst_111 {dimension_numbers = #tpu.dot_dimension_numbers<[1], [0], [0], [1], [0, 0, 1, 1], [], []>} : vector<8x64xf32>, vector<64x48xf32>, vector<8x48xf32> -> vector<8x48xf32>
    %c0_112 = arith.constant 0 : index
    %c0_113 = arith.constant 0 : index
    %223 = vector.load %arg31[%c0_112, %c0_113] : memref<1x48xf32, #tpu.memory_space<vmem>>, vector<1x48xf32>
    %224 = vector.broadcast %223 : vector<1x48xf32> to vector<8x48xf32>
    %225 = arith.addf %222, %224 : vector<8x48xf32>
    %c0_114 = arith.constant 0 : index
    %c0_115 = arith.constant 0 : index
    %226 = vector.load %arg32[%c0_114, %c0_115] : memref<8x16xf32, #tpu.memory_space<vmem>>, vector<8x16xf32>
    tpu.vector_store %arg32[%c0_114, %c0_115], %118 {strides = array<i32>} : memref<8x16xf32, #tpu.memory_space<vmem>>, vector<8x16xf32>,
    %c0_116 = arith.constant 0 : index
    %c0_117 = arith.constant 0 : index
    %227 = vector.load %arg33[%c0_116, %c0_117] : memref<8x48xf32, #tpu.memory_space<vmem>>, vector<8x48xf32>
    tpu.vector_store %arg33[%c0_116, %c0_117], %225 {strides = array<i32>} : memref<8x48xf32, #tpu.memory_space<vmem>>, vector<8x48xf32>,
    %c0_118 = arith.constant 0 : index
    %c0_119 = arith.constant 0 : index
    %228 = vector.load %arg34[%c0_118, %c0_119] : memref<8x16xf32, #tpu.memory_space<vmem>>, vector<8x16xf32>
    tpu.vector_store %arg34[%c0_118, %c0_119], %107 {strides = array<i32>} : memref<8x16xf32, #tpu.memory_space<vmem>>, vector<8x16xf32>,
    %c0_120 = arith.constant 0 : index
    %c0_121 = arith.constant 0 : index
    %229 = vector.load %arg35[%c0_120, %c0_121] : memref<8x16xf32, #tpu.memory_space<vmem>>, vector<8x16xf32>
    tpu.vector_store %arg35[%c0_120, %c0_121], %112 {strides = array<i32>} : memref<8x16xf32, #tpu.memory_space<vmem>>, vector<8x16xf32>,
    return
  }
}

</mosaic_0001>

<llo_original>
// kernel: tpu_custom_call.1
$region0: #{tpu_custom_call.1}
  #allocation0 [shape = 'u32[]', space=smem, size = 0x4, offset = 0x4, fixed_abs, tag = 'smem constant byte address 0x4 - core index']
  #allocation1 [shape = 'u32[144,128]{1,0:T(1,128)}', space=vmem, size = 0x12000, scoped, tag = 'internal scratch']
  %s0 = inlined_call_operand.smem [shape: u32[36], index: -1, kind: input, shape index: {}]
  %s1 = sld [smem:[%s0]]
  %s2 = scalar_lea.smem %s0, 1
  %s3 = sld [smem:[%s2]]
  %s4 = scalar_lea.smem %s0, 2
  %s5 = sld [smem:[%s4]]
  %s6 = scalar_lea.smem %s0, 3
  %s7 = sld [smem:[%s6]]
  %s8 = scalar_lea.smem %s0, 4
  %s9 = sld [smem:[%s8]]
  %s10 = scalar_lea.smem %s0, 5
  %s11 = sld [smem:[%s10]]
  %s12 = scalar_lea.smem %s0, 6
  %s13 = sld [smem:[%s12]]
  %s14 = scalar_lea.smem %s0, 7
  %s15 = sld [smem:[%s14]]
  %s16 = scalar_lea.smem %s0, 8
  %s17 = sld [smem:[%s16]]
  %s18 = scalar_lea.smem %s0, 9
  %s19 = sld [smem:[%s18]]
  %s20 = scalar_lea.smem %s0, 10
  %s21 = sld [smem:[%s20]]
  %s22 = scalar_lea.smem %s0, 11
  %s23 = sld [smem:[%s22]]
  %s24 = scalar_lea.smem %s0, 12
  %s25 = sld [smem:[%s24]]
  %s26 = scalar_lea.smem %s0, 13
  %s27 = sld [smem:[%s26]]
  %s28 = scalar_lea.smem %s0, 14
  %s29 = sld [smem:[%s28]]
  %s30 = scalar_lea.smem %s0, 15
  %s31 = sld [smem:[%s30]]
  %s32 = scalar_lea.smem %s0, 16
  %s33 = sld [smem:[%s32]]
  %s34 = scalar_lea.smem %s0, 17
  %s35 = sld [smem:[%s34]]
  %s36 = scalar_lea.smem %s0, 18
  %s37 = sld [smem:[%s36]]
  %s38 = scalar_lea.smem %s0, 19
  %s39 = sld [smem:[%s38]]
  %s40 = scalar_lea.smem %s0, 20
  %s41 = sld [smem:[%s40]]
  %s42 = scalar_lea.smem %s0, 21
  %s43 = sld [smem:[%s42]]
  %s44 = scalar_lea.smem %s0, 22
  %s45 = sld [smem:[%s44]]
  %s46 = scalar_lea.smem %s0, 23
  %s47 = sld [smem:[%s46]]
  %s48 = scalar_lea.smem %s0, 24
  %s49 = sld [smem:[%s48]]
  %s50 = scalar_lea.smem %s0, 25
  %s51 = sld [smem:[%s50]]
  %s52 = scalar_lea.smem %s0, 26
  %s53 = sld [smem:[%s52]]
  %s54 = scalar_lea.smem %s0, 27
  %s55 = sld [smem:[%s54]]
  %s56 = scalar_lea.smem %s0, 28
  %s57 = sld [smem:[%s56]]
  %s58 = scalar_lea.smem %s0, 29
  %s59 = sld [smem:[%s58]]
  %s60 = scalar_lea.smem %s0, 30
  %s61 = sld [smem:[%s60]]
  %s62 = scalar_lea.smem %s0, 31
  %s63 = sld [smem:[%s62]]
  %s64 = scalar_lea.smem %s0, 32
  %s65 = sld [smem:[%s64]]
  %s66 = scalar_lea.smem %s0, 33
  %s67 = sld [smem:[%s66]]
  %s68 = scalar_lea.smem %s0, 34
  %s69 = sld [smem:[%s68]]
  %s70 = scalar_lea.smem %s0, 35
  %s71 = sld [smem:[%s70]]
  %72 = xla_tuple %s65, %s67, %s69, %s71
  %s73 = sld [smem:[#allocation0]]
  $region162: #{tpu_custom_call.1} parent=0
    _
  %s75 = ssub.s32 1, %s73
  %s76 = scalar_select 0, %s75, %s73
  $region1: #{tpu_custom_call.1} parent=0
    #allocation2 [shape = 'u8[4096]{0}', space=vmem, size = 0x1000, scoped, tag = 'output window, operand 0, single buffered']
    #allocation3 [shape = 's32[1]{0}', space=sflag, size = 0x4, scoped, tag = 'scoped memory for tpu_custom_call.1']
    #allocation4 [shape = 'u8[4096]{0}', space=vmem, size = 0x1000, scoped, tag = 'output window, operand 1, single buffered']
    #allocation5 [shape = 's32[1]{0}', space=sflag, size = 0x4, scoped, tag = 'scoped memory for tpu_custom_call.1']
    #allocation6 [shape = 'u8[4096]{0}', space=vmem, size = 0x1000, scoped, tag = 'output window, operand 2, single buffered']
    #allocation7 [shape = 'u8[4096]{0}', space=vmem, size = 0x1000, scoped, tag = 'output window, operand 3, single buffered']
    #allocation8 [shape = 's32[1]{0}', space=sflag, size = 0x4, scoped, tag = 'scoped memory for tpu_custom_call.1']
    %77 = vsyncpa [#allocation3], 0
    %78 = vsyncpa [#allocation5], 0
    %79 = vsyncpa [#allocation8], 0
    // Predicated region
    $region2: #{tpu_custom_call.1} parent=1 // pred_check
      _
    $region3: #{tpu_custom_call.1} parent=1 // pred_check_branch
      %81 = sbr.rel (0) target = $region5
    $region4: #{tpu_custom_call.1} parent=1 // pred_region
      _
    $region5: #{tpu_custom_call.1} parent=1 // pred_fallthru
      _
    // Predicated region
    $region6: #{tpu_custom_call.1} parent=1 // pred_check
      _
    $region7: #{tpu_custom_call.1} parent=1 // pred_check_branch
      %83 = sbr.rel (0) target = $region9
    $region8: #{tpu_custom_call.1} parent=1 // pred_region
      _
    $region9: #{tpu_custom_call.1} parent=1 // pred_fallthru
      _
    // Predicated region
    $region10: #{tpu_custom_call.1} parent=1 // pred_check
      _
    $region11: #{tpu_custom_call.1} parent=1 // pred_check_branch
      %85 = sbr.rel (0) target = $region13
    $region12: #{tpu_custom_call.1} parent=1 // pred_region
      _
    $region13: #{tpu_custom_call.1} parent=1 // pred_fallthru
      _
    // Predicated region
    $region14: #{tpu_custom_call.1} parent=1 // pred_check
      _
    $region15: #{tpu_custom_call.1} parent=1 // pred_check_branch
      %87 = sbr.rel (0) target = $region17
    $region16: #{tpu_custom_call.1} parent=1 // pred_region
      _
    $region17: #{tpu_custom_call.1} parent=1 // pred_fallthru
      _
    // Predicated region
    $region18: #{tpu_custom_call.1} parent=1 // pred_check
      _
    $region19: #{tpu_custom_call.1} parent=1 // pred_check_branch
      %89 = sbr.rel (0) target = $region21
    $region20: #{tpu_custom_call.1} parent=1 // pred_region
      _
    $region21: #{tpu_custom_call.1} parent=1 // pred_fallthru
      _
    // Predicated region
    $region22: #{tpu_custom_call.1} parent=1 // pred_check
      _
    $region23: #{tpu_custom_call.1} parent=1 // pred_check_branch
      %91 = sbr.rel (0) target = $region25
    $region24: #{tpu_custom_call.1} parent=1 // pred_region
      _
    $region25: #{tpu_custom_call.1} parent=1 // pred_fallthru
      _
    // Predicated region
    $region26: #{tpu_custom_call.1} parent=1 // pred_check
      _
    $region27: #{tpu_custom_call.1} parent=1 // pred_check_branch
      %93 = sbr.rel (0) target = $region29
    $region28: #{tpu_custom_call.1} parent=1 // pred_region
      _
    $region29: #{tpu_custom_call.1} parent=1 // pred_fallthru
      _
    // Predicated region
    $region30: #{tpu_custom_call.1} parent=1 // pred_check
      _
    $region31: #{tpu_custom_call.1} parent=1 // pred_check_branch
      %95 = sbr.rel (0) target = $region33
    $region32: #{tpu_custom_call.1} parent=1 // pred_region
      _
    $region33: #{tpu_custom_call.1} parent=1 // pred_fallthru
      _
    // Predicated region
    $region34: #{tpu_custom_call.1} parent=1 // pred_check
      _
    $region35: #{tpu_custom_call.1} parent=1 // pred_check_branch
      %97 = sbr.rel (0) target = $region37
    $region36: #{tpu_custom_call.1} parent=1 // pred_region
      _
    $region37: #{tpu_custom_call.1} parent=1 // pred_fallthru
      _
    // Predicated region
    $region38: #{tpu_custom_call.1} parent=1 // pred_check
      _
    $region39: #{tpu_custom_call.1} parent=1 // pred_check_branch
      %99 = sbr.rel (0) target = $region41
    $region40: #{tpu_custom_call.1} parent=1 // pred_region
      _
    $region41: #{tpu_custom_call.1} parent=1 // pred_fallthru
      _
    // Predicated region
    $region42: #{tpu_custom_call.1} parent=1 // pred_check
      _
    $region43: #{tpu_custom_call.1} parent=1 // pred_check_branch
      %101 = sbr.rel (0) target = $region45
    $region44: #{tpu_custom_call.1} parent=1 // pred_region
      _
    $region45: #{tpu_custom_call.1} parent=1 // pred_fallthru
      _
    // Predicated region
    $region46: #{tpu_custom_call.1} parent=1 // pred_check
      _
    $region47: #{tpu_custom_call.1} parent=1 // pred_check_branch
      %103 = sbr.rel (0) target = $region49
    $region48: #{tpu_custom_call.1} parent=1 // pred_region
      _
    $region49: #{tpu_custom_call.1} parent=1 // pred_fallthru
      _
    // Predicated region
    $region50: #{tpu_custom_call.1} parent=1 // pred_check
      _
    $region51: #{tpu_custom_call.1} parent=1 // pred_check_branch
      %105 = sbr.rel (0) target = $region53
    $region52: #{tpu_custom_call.1} parent=1 // pred_region
      _
    $region53: #{tpu_custom_call.1} parent=1 // pred_fallthru
      _
    // Predicated region
    $region54: #{tpu_custom_call.1} parent=1 // pred_check
      _
    $region55: #{tpu_custom_call.1} parent=1 // pred_check_branch
      %107 = sbr.rel (0) target = $region57
    $region56: #{tpu_custom_call.1} parent=1 // pred_region
      _
    $region57: #{tpu_custom_call.1} parent=1 // pred_fallthru
      _
    // Predicated region
    $region58: #{tpu_custom_call.1} parent=1 // pred_check
      _
    $region59: #{tpu_custom_call.1} parent=1 // pred_check_branch
      %109 = sbr.rel (0) target = $region61
    $region60: #{tpu_custom_call.1} parent=1 // pred_region
      _
    $region61: #{tpu_custom_call.1} parent=1 // pred_fallthru
      _
    // Predicated region
    $region62: #{tpu_custom_call.1} parent=1 // pred_check
      _
    $region63: #{tpu_custom_call.1} parent=1 // pred_check_branch
      %111 = sbr.rel (0) target = $region65
    $region64: #{tpu_custom_call.1} parent=1 // pred_region
      _
    $region65: #{tpu_custom_call.1} parent=1 // pred_fallthru
      _
    // Predicated region
    $region66: #{tpu_custom_call.1} parent=1 // pred_check
      _
    $region67: #{tpu_custom_call.1} parent=1 // pred_check_branch
      %113 = sbr.rel (0) target = $region69
    $region68: #{tpu_custom_call.1} parent=1 // pred_region
      _
    $region69: #{tpu_custom_call.1} parent=1 // pred_fallthru
      _
    // Predicated region
    $region70: #{tpu_custom_call.1} parent=1 // pred_check
      _
    $region71: #{tpu_custom_call.1} parent=1 // pred_check_branch
      %115 = sbr.rel (0) target = $region73
    $region72: #{tpu_custom_call.1} parent=1 // pred_region
      _
    $region73: #{tpu_custom_call.1} parent=1 // pred_fallthru
      _
    // Predicated region
    $region74: #{tpu_custom_call.1} parent=1 // pred_check
      _
    $region75: #{tpu_custom_call.1} parent=1 // pred_check_branch
      %117 = sbr.rel (0) target = $region77
    $region76: #{tpu_custom_call.1} parent=1 // pred_region
      _
    $region77: #{tpu_custom_call.1} parent=1 // pred_fallthru
      _
    // Predicated region
    $region78: #{tpu_custom_call.1} parent=1 // pred_check
      _
    $region79: #{tpu_custom_call.1} parent=1 // pred_check_branch
      %119 = sbr.rel (0) target = $region81
    $region80: #{tpu_custom_call.1} parent=1 // pred_region
      _
    $region81: #{tpu_custom_call.1} parent=1 // pred_fallthru
      _
    // Predicated region
    $region82: #{tpu_custom_call.1} parent=1 // pred_check
      _
    $region83: #{tpu_custom_call.1} parent=1 // pred_check_branch
      %121 = sbr.rel (0) target = $region85
    $region84: #{tpu_custom_call.1} parent=1 // pred_region
      _
    $region85: #{tpu_custom_call.1} parent=1 // pred_fallthru
      _
    // Predicated region
    $region86: #{tpu_custom_call.1} parent=1 // pred_check
      _
    $region87: #{tpu_custom_call.1} parent=1 // pred_check_branch
      %123 = sbr.rel (0) target = $region89
    $region88: #{tpu_custom_call.1} parent=1 // pred_region
      _
    $region89: #{tpu_custom_call.1} parent=1 // pred_fallthru
      _
    // Predicated region
    $region90: #{tpu_custom_call.1} parent=1 // pred_check
      _
    $region91: #{tpu_custom_call.1} parent=1 // pred_check_branch
      %125 = sbr.rel (0) target = $region93
    $region92: #{tpu_custom_call.1} parent=1 // pred_region
      _
    $region93: #{tpu_custom_call.1} parent=1 // pred_fallthru
      _
    // Predicated region
    $region94: #{tpu_custom_call.1} parent=1 // pred_check
      _
    $region95: #{tpu_custom_call.1} parent=1 // pred_check_branch
      %127 = sbr.rel (0) target = $region97
    $region96: #{tpu_custom_call.1} parent=1 // pred_region
      _
    $region97: #{tpu_custom_call.1} parent=1 // pred_fallthru
      _
    // Predicated region
    $region98: #{tpu_custom_call.1} parent=1 // pred_check
      _
    $region99: #{tpu_custom_call.1} parent=1 // pred_check_branch
      %129 = sbr.rel (0) target = $region101
    $region100: #{tpu_custom_call.1} parent=1 // pred_region
      _
    $region101: #{tpu_custom_call.1} parent=1 // pred_fallthru
      _
    // Predicated region
    $region102: #{tpu_custom_call.1} parent=1 // pred_check
      _
    $region103: #{tpu_custom_call.1} parent=1 // pred_check_branch
      %131 = sbr.rel (0) target = $region105
    $region104: #{tpu_custom_call.1} parent=1 // pred_region
      _
    $region105: #{tpu_custom_call.1} parent=1 // pred_fallthru
      _
    // Predicated region
    $region106: #{tpu_custom_call.1} parent=1 // pred_check
      _
    $region107: #{tpu_custom_call.1} parent=1 // pred_check_branch
      %133 = sbr.rel (0) target = $region109
    $region108: #{tpu_custom_call.1} parent=1 // pred_region
      _
    $region109: #{tpu_custom_call.1} parent=1 // pred_fallthru
      _
    // Predicated region
    $region110: #{tpu_custom_call.1} parent=1 // pred_check
      _
    $region111: #{tpu_custom_call.1} parent=1 // pred_check_branch
      %135 = sbr.rel (0) target = $region113
    $region112: #{tpu_custom_call.1} parent=1 // pred_region
      _
    $region113: #{tpu_custom_call.1} parent=1 // pred_fallthru
      _
    // Predicated region
    $region114: #{tpu_custom_call.1} parent=1 // pred_check
      _
    $region115: #{tpu_custom_call.1} parent=1 // pred_check_branch
      %137 = sbr.rel (0) target = $region117
    $region116: #{tpu_custom_call.1} parent=1 // pred_region
      _
    $region117: #{tpu_custom_call.1} parent=1 // pred_fallthru
      _
    // Predicated region
    $region118: #{tpu_custom_call.1} parent=1 // pred_check
      _
    $region119: #{tpu_custom_call.1} parent=1 // pred_check_branch
      %139 = sbr.rel (0) target = $region121
    $region120: #{tpu_custom_call.1} parent=1 // pred_region
      _
    $region121: #{tpu_custom_call.1} parent=1 // pred_fallthru
      _
    // Predicated region
    $region122: #{tpu_custom_call.1} parent=1 // pred_check
      _
    $region123: #{tpu_custom_call.1} parent=1 // pred_check_branch
      %141 = sbr.rel (0) target = $region125
    $region124: #{tpu_custom_call.1} parent=1 // pred_region
      _
    $region125: #{tpu_custom_call.1} parent=1 // pred_fallthru
      _
    // Predicated region
    $region126: #{tpu_custom_call.1} parent=1 // pred_check
      _
    $region127: #{tpu_custom_call.1} parent=1 // pred_check_branch
      %143 = sbr.rel (0) target = $region129
    $region128: #{tpu_custom_call.1} parent=1 // pred_region
      _
    $region129: #{tpu_custom_call.1} parent=1 // pred_fallthru
      _
    %v144 = vld [vmem:[%s1] sm:$0xff]
    %v145 = vld [vmem:[%s5] sm:$0xff]
    %v146 = vld [vmem:[%s5 + $0x8] sm:$0xff]
    %v147 = vld [vmem:[%s5 + $0x10] sm:$0xff]
    %v148 = vld [vmem:[%s5 + $0x18] sm:$0xff]
    %v149 = vld [vmem:[%s5 + $0x20] sm:$0xff]
    %v150 = vld [vmem:[%s5 + $0x28] sm:$0xff]
    %v151 = vld [vmem:[%s5 + $0x30] sm:$0xff]
    %v152 = vld [vmem:[%s5 + $0x38] sm:$0xff]
    %v153 = vld [vmem:[%s7] sm:$0x1]
    %v155 = vlaneseq
    %v156 = vshrl.u32 %v155, 7
    %v157 = vsub.s32 0, %v156
    %v158 = vrot.slane %v153, %v157
    %vm160 = vcmask 523264
    %v162 = vsel %vm160, %v144, 0
    %164 = vmatprep.subr.mxu0 0.0
    %165 = vmatpush1.msra.mxu0 0.0
    %166 = vmatprep.subr.mxu0 0.0
    %167 = vmatpush1.msra.mxu0 0.0
    %168 = vmatprep.subr.mxu0 0.0
    %169 = vmatpush1.msra.mxu0 0.0
    %170 = vmatprep.subr.mxu0 0.0
    %171 = vmatpush1.msra.mxu0 0.0
    %172 = vmatprep.subr.mxu0 0.0
    %173 = vmatpush1.msra.mxu0 0.0
    %174 = vmatprep.subr.mxu0 0.0
    %175 = vmatpush1.msra.mxu0 0.0
    %176 = vmatprep.subr.mxu0 0.0
    %177 = vmatpush1.msra.mxu0 0.0
    %178 = vmatprep.subr.mxu0 0.0
    %179 = vmatpush1.msra.mxu0 0.0
    %180 = vmatprep.subr.mxu0 0.0
    %181 = vmatpush1.msra.mxu0 %v152
    %182 = vmatprep.subr.mxu0 0.0
    %183 = vmatpush1.msra.mxu0 %v151
    %184 = vmatprep.subr.mxu0 0.0
    %185 = vmatpush1.msra.mxu0 %v150
    %186 = vmatprep.subr.mxu0 0.0
    %187 = vmatpush1.msra.mxu0 %v149
    %188 = vmatprep.subr.mxu0 0.0
    %189 = vmatpush1.msra.mxu0 %v148
    %190 = vmatprep.subr.mxu0 0.0
    %191 = vmatpush1.msra.mxu0 %v147
    %192 = vmatprep.subr.mxu0 0.0
    %193 = vmatpush1.msra.mxu0 %v146
    %194 = vmatprep.subr.mxu0 0.0
    %195 = vmatpush1.msra.mxu0 %v145
    %196 = vmatprep.subr.mxu0 0.0
    %197 = vmatpush2.msra.mxu0 0.0
    %198 = vmatprep.subr.mxu0 0.0
    %199 = vmatpush2.msra.mxu0 0.0
    %200 = vmatprep.subr.mxu0 0.0
    %201 = vmatpush2.msra.mxu0 0.0
    %202 = vmatprep.subr.mxu0 0.0
    %203 = vmatpush2.msra.mxu0 0.0
    %204 = vmatprep.subr.mxu0 0.0
    %205 = vmatpush2.msra.mxu0 0.0
    %206 = vmatprep.subr.mxu0 0.0
    %207 = vmatpush2.msra.mxu0 0.0
    %208 = vmatprep.subr.mxu0 0.0
    %209 = vmatpush2.msra.mxu0 0.0
    %210 = vmatprep.subr.mxu0 0.0
    %211 = vmatpush2.msra.mxu0 0.0
    %212 = vmatprep.subr.mxu0 0.0
    %213 = vmatpush2.msra.mxu0 0.0
    %214 = vmatprep.subr.mxu0 0.0
    %215 = vmatpush2.msra.mxu0 0.0
    %216 = vmatprep.subr.mxu0 0.0
    %217 = vmatpush2.msra.mxu0 0.0
    %218 = vmatprep.subr.mxu0 0.0
    %219 = vmatpush2.msra.mxu0 0.0
    %220 = vmatprep.subr.mxu0 0.0
    %221 = vmatpush2.msra.mxu0 0.0
    %222 = vmatprep.subr.mxu0 0.0
    %223 = vmatpush2.msra.mxu0 0.0
    %224 = vmatprep.subr.mxu0 0.0
    %225 = vmatpush2.msra.mxu0 0.0
    %226 = vmatprep.subr.mxu0 0.0
    %227 = vmatpush2.msra.mxu0 0.0
    %228 = vmatprep.mubr.f32.mxu0 0.0
    %229 = vmatmul.mubr.f32.gmra.mxu0 %v162
    %v230 = vpop.f32.mrf.mxu0
    %v231 = vadd.f32 %v158, %v230
    %v232 = vpop.f32.mrf.mxu0
    %233 = vdwg.mxu0
    %v234 = vsel %vm160, %v231, 0.0
    %v235 = vrot.slane %v234, 4
    %v236 = vadd.f32 %v234, %v235
    %v237 = vrot.slane %v236, 2
    %v238 = vadd.f32 %v236, %v237
    %v239 = vrot.slane %v238, 1
    %v240 = vadd.f32 %v238, %v239
    %v241 = vrcp.pop 8.0
    %v242 = vmul.f32 %v240, %v241
    %v243 = vsub.f32 %v231, %v242
    %v244 = vmul.f32 %v243, %v243
    %v245 = vsel %vm160, %v244, 0.0
    %v246 = vrot.slane %v245, 4
    %v247 = vadd.f32 %v245, %v246
    %v248 = vrot.slane %v247, 2
    %v249 = vadd.f32 %v247, %v248
    %v250 = vrot.slane %v249, 1
    %v251 = vadd.f32 %v249, %v250
    %v252 = vmul.f32 %v251, %v241
    %v253 = vadd.f32 %v252, 1e-05
    %v254 = vrsqrt.pop %v253
    %v255 = vmul.f32 %v243, %v254
    %v256 = vld [vmem:[%s9] sm:$0x1]
    %v258 = vlaneseq
    %v259 = vshrl.u32 %v258, 7
    %v260 = vsub.s32 0, %v259
    %v261 = vrot.slane %v256, %v260
    %v263 = vmul.f32 %v255, %v261
    %v264 = vld [vmem:[%s11] sm:$0x1]
    %v266 = vlaneseq
    %v267 = vshrl.u32 %v266, 7
    %v268 = vsub.s32 0, %v267
    %v269 = vrot.slane %v264, %v268
    %v271 = vadd.f32 %v263, %v269
    %vm272 = vcmp.ge.f32.partialorder %v271, 0.0
    %v273 = vmul.f32 %v271, 0.2
    %v274 = vsel %vm272, %v271, %v273
    %v275 = vld [vmem:[%s13] sm:$0xff]
    %v276 = vld [vmem:[%s13 + $0x8] sm:$0xff]
    %v277 = vld [vmem:[%s13 + $0x10] sm:$0xff]
    %v278 = vld [vmem:[%s13 + $0x18] sm:$0xff]
    %v279 = vld [vmem:[%s13 + $0x20] sm:$0xff]
    %v280 = vld [vmem:[%s13 + $0x28] sm:$0xff]
    %v281 = vld [vmem:[%s13 + $0x30] sm:$0xff]
    %v282 = vld [vmem:[%s13 + $0x38] sm:$0xff]
    %v283 = vld [vmem:[%s15] sm:$0x1]
    %v285 = vlaneseq
    %v286 = vshrl.u32 %v285, 7
    %v287 = vsub.s32 0, %v286
    %v288 = vrot.slane %v283, %v287
    %v291 = vsel %vm160, %v274, 0
    %293 = vmatprep.subr.mxu0 0.0
    %294 = vmatpush1.msra.mxu0 0.0
    %295 = vmatprep.subr.mxu0 0.0
    %296 = vmatpush1.msra.mxu0 0.0
    %297 = vmatprep.subr.mxu0 0.0
    %298 = vmatpush1.msra.mxu0 0.0
    %299 = vmatprep.subr.mxu0 0.0
    %300 = vmatpush1.msra.mxu0 0.0
    %301 = vmatprep.subr.mxu0 0.0
    %302 = vmatpush1.msra.mxu0 0.0
    %303 = vmatprep.subr.mxu0 0.0
    %304 = vmatpush1.msra.mxu0 0.0
    %305 = vmatprep.subr.mxu0 0.0
    %306 = vmatpush1.msra.mxu0 0.0
    %307 = vmatprep.subr.mxu0 0.0
    %308 = vmatpush1.msra.mxu0 0.0
    %309 = vmatprep.subr.mxu0 0.0
    %310 = vmatpush1.msra.mxu0 %v282
    %311 = vmatprep.subr.mxu0 0.0
    %312 = vmatpush1.msra.mxu0 %v281
    %313 = vmatprep.subr.mxu0 0.0
    %314 = vmatpush1.msra.mxu0 %v280
    %315 = vmatprep.subr.mxu0 0.0
    %316 = vmatpush1.msra.mxu0 %v279
    %317 = vmatprep.subr.mxu0 0.0
    %318 = vmatpush1.msra.mxu0 %v278
    %319 = vmatprep.subr.mxu0 0.0
    %320 = vmatpush1.msra.mxu0 %v277
    %321 = vmatprep.subr.mxu0 0.0
    %322 = vmatpush1.msra.mxu0 %v276
    %323 = vmatprep.subr.mxu0 0.0
    %324 = vmatpush1.msra.mxu0 %v275
    %325 = vmatprep.subr.mxu0 0.0
    %326 = vmatpush2.msra.mxu0 0.0
    %327 = vmatprep.subr.mxu0 0.0
    %328 = vmatpush2.msra.mxu0 0.0
    %329 = vmatprep.subr.mxu0 0.0
    %330 = vmatpush2.msra.mxu0 0.0
    %331 = vmatprep.subr.mxu0 0.0
    %332 = vmatpush2.msra.mxu0 0.0
    %333 = vmatprep.subr.mxu0 0.0
    %334 = vmatpush2.msra.mxu0 0.0
    %335 = vmatprep.subr.mxu0 0.0
    %336 = vmatpush2.msra.mxu0 0.0
    %337 = vmatprep.subr.mxu0 0.0
    %338 = vmatpush2.msra.mxu0 0.0
    %339 = vmatprep.subr.mxu0 0.0
    %340 = vmatpush2.msra.mxu0 0.0
    %341 = vmatprep.subr.mxu0 0.0
    %342 = vmatpush2.msra.mxu0 0.0
    %343 = vmatprep.subr.mxu0 0.0
    %344 = vmatpush2.msra.mxu0 0.0
    %345 = vmatprep.subr.mxu0 0.0
    %346 = vmatpush2.msra.mxu0 0.0
    %347 = vmatprep.subr.mxu0 0.0
    %348 = vmatpush2.msra.mxu0 0.0
    %349 = vmatprep.subr.mxu0 0.0
    %350 = vmatpush2.msra.mxu0 0.0
    %351 = vmatprep.subr.mxu0 0.0
    %352 = vmatpush2.msra.mxu0 0.0
    %353 = vmatprep.subr.mxu0 0.0
    %354 = vmatpush2.msra.mxu0 0.0
    %355 = vmatprep.subr.mxu0 0.0
    %356 = vmatpush2.msra.mxu0 0.0
    %357 = vmatprep.mubr.f32.mxu0 0.0
    %358 = vmatmul.mubr.f32.gmra.mxu0 %v291
    %v359 = vpop.f32.mrf.mxu0
    %v360 = vadd.f32 %v288, %v359
    %v361 = vpop.f32.mrf.mxu0
    %362 = vdwg.mxu0
    %vm363 = vcmask 392192
    %v364 = vsel %vm363, %v360, 0.0
    %v365 = vrot.slane %v364, 4
    %v366 = vadd.f32 %v364, %v365
    %v367 = vrot.slane %v366, 2
    %v368 = vadd.f32 %v366, %v367
    %v369 = vrot.slane %v368, 1
    %v370 = vadd.f32 %v368, %v369
    %v371 = vmul.f32 %v370, %v241
    %v372 = vsub.f32 %v360, %v371
    %v373 = vmul.f32 %v372, %v372
    %v374 = vsel %vm363, %v373, 0.0
    %v375 = vrot.slane %v374, 4
    %v376 = vadd.f32 %v374, %v375
    %v377 = vrot.slane %v376, 2
    %v378 = vadd.f32 %v376, %v377
    %v379 = vrot.slane %v378, 1
    %v380 = vadd.f32 %v378, %v379
    %v381 = vmul.f32 %v380, %v241
    %v382 = vadd.f32 %v381, 1e-05
    %v383 = vrsqrt.pop %v382
    %v384 = vmul.f32 %v372, %v383
    %v385 = vld [vmem:[%s17] sm:$0x1]
    %v387 = vlaneseq
    %v388 = vshrl.u32 %v387, 7
    %v389 = vsub.s32 0, %v388
    %v390 = vrot.slane %v385, %v389
    %v392 = vmul.f32 %v384, %v390
    %v393 = vld [vmem:[%s19] sm:$0x1]
    %v395 = vlaneseq
    %v396 = vshrl.u32 %v395, 7
    %v397 = vsub.s32 0, %v396
    %v398 = vrot.slane %v393, %v397
    %v400 = vadd.f32 %v392, %v398
    %vm401 = vcmp.ge.f32.partialorder %v400, 0.0
    %v402 = vmul.f32 %v400, 0.2
    %v403 = vsel %vm401, %v400, %v402
    %v404 = vld [vmem:[%s21] sm:$0xff]
    %v405 = vld [vmem:[%s21 + $0x8] sm:$0xff]
    %v406 = vld [vmem:[%s21 + $0x10] sm:$0xff]
    %v407 = vld [vmem:[%s21 + $0x18] sm:$0xff]
    %v408 = vld [vmem:[%s21 + $0x20] sm:$0xff]
    %v409 = vld [vmem:[%s21 + $0x28] sm:$0xff]
    %v410 = vld [vmem:[%s23] sm:$0x1]
    %v412 = vlaneseq
    %v413 = vshrl.u32 %v412, 7
    %v414 = vsub.s32 0, %v413
    %v415 = vrot.slane %v410, %v414
    %v418 = vsel %vm363, %v403, 0
    %420 = vmatprep.subr.mxu0 0.0
    %421 = vmatpush1.msra.mxu0 0.0
    %422 = vmatprep.subr.mxu0 0.0
    %423 = vmatpush1.msra.mxu0 0.0
    %424 = vmatprep.subr.mxu0 0.0
    %425 = vmatpush1.msra.mxu0 0.0
    %426 = vmatprep.subr.mxu0 0.0
    %427 = vmatpush1.msra.mxu0 0.0
    %428 = vmatprep.subr.mxu0 0.0
    %429 = vmatpush1.msra.mxu0 0.0
    %430 = vmatprep.subr.mxu0 0.0
    %431 = vmatpush1.msra.mxu0 0.0
    %432 = vmatprep.subr.mxu0 0.0
    %433 = vmatpush1.msra.mxu0 0.0
    %434 = vmatprep.subr.mxu0 0.0
    %435 = vmatpush1.msra.mxu0 0.0
    %436 = vmatprep.subr.mxu0 0.0
    %437 = vmatpush1.msra.mxu0 0.0
    %438 = vmatprep.subr.mxu0 0.0
    %439 = vmatpush1.msra.mxu0 0.0
    %440 = vmatprep.subr.mxu0 0.0
    %441 = vmatpush1.msra.mxu0 %v409
    %442 = vmatprep.subr.mxu0 0.0
    %443 = vmatpush1.msra.mxu0 %v408
    %444 = vmatprep.subr.mxu0 0.0
    %445 = vmatpush1.msra.mxu0 %v407
    %446 = vmatprep.subr.mxu0 0.0
    %447 = vmatpush1.msra.mxu0 %v406
    %448 = vmatprep.subr.mxu0 0.0
    %449 = vmatpush1.msra.mxu0 %v405
    %450 = vmatprep.subr.mxu0 0.0
    %451 = vmatpush1.msra.mxu0 %v404
    %452 = vmatprep.subr.mxu0 0.0
    %453 = vmatpush2.msra.mxu0 0.0
    %454 = vmatprep.subr.mxu0 0.0
    %455 = vmatpush2.msra.mxu0 0.0
    %456 = vmatprep.subr.mxu0 0.0
    %457 = vmatpush2.msra.mxu0 0.0
    %458 = vmatprep.subr.mxu0 0.0
    %459 = vmatpush2.msra.mxu0 0.0
    %460 = vmatprep.subr.mxu0 0.0
    %461 = vmatpush2.msra.mxu0 0.0
    %462 = vmatprep.subr.mxu0 0.0
    %463 = vmatpush2.msra.mxu0 0.0
    %464 = vmatprep.subr.mxu0 0.0
    %465 = vmatpush2.msra.mxu0 0.0
    %466 = vmatprep.subr.mxu0 0.0
    %467 = vmatpush2.msra.mxu0 0.0
    %468 = vmatprep.subr.mxu0 0.0
    %469 = vmatpush2.msra.mxu0 0.0
    %470 = vmatprep.subr.mxu0 0.0
    %471 = vmatpush2.msra.mxu0 0.0
    %472 = vmatprep.subr.mxu0 0.0
    %473 = vmatpush2.msra.mxu0 0.0
    %474 = vmatprep.subr.mxu0 0.0
    %475 = vmatpush2.msra.mxu0 0.0
    %476 = vmatprep.subr.mxu0 0.0
    %477 = vmatpush2.msra.mxu0 0.0
    %478 = vmatprep.subr.mxu0 0.0
    %479 = vmatpush2.msra.mxu0 0.0
    %480 = vmatprep.subr.mxu0 0.0
    %481 = vmatpush2.msra.mxu0 0.0
    %482 = vmatprep.subr.mxu0 0.0
    %483 = vmatpush2.msra.mxu0 0.0
    %484 = vmatprep.mubr.f32.mxu0 0.0
    %485 = vmatmul.mubr.f32.gmra.mxu0 %v418
    %v486 = vpop.f32.mrf.mxu0
    %v487 = vadd.f32 %v415, %v486
    %v488 = vpop.f32.mrf.mxu0
    %489 = vdwg.mxu0
    %vm490 = vcmask 261120
    %v491 = vsel %vm490, %v487, 0.0
    %v492 = vrot.slane %v491, 4
    %v493 = vadd.f32 %v491, %v492
    %v494 = vrot.slane %v493, 2
    %v495 = vadd.f32 %v493, %v494
    %v496 = vrot.slane %v495, 1
    %v497 = vadd.f32 %v495, %v496
    %v498 = vmul.f32 %v497, %v241
    %v499 = vsub.f32 %v487, %v498
    %v500 = vmul.f32 %v499, %v499
    %v501 = vsel %vm490, %v500, 0.0
    %v502 = vrot.slane %v501, 4
    %v503 = vadd.f32 %v501, %v502
    %v504 = vrot.slane %v503, 2
    %v505 = vadd.f32 %v503, %v504
    %v506 = vrot.slane %v505, 1
    %v507 = vadd.f32 %v505, %v506
    %v508 = vmul.f32 %v507, %v241
    %v509 = vadd.f32 %v508, 1e-05
    %v510 = vrsqrt.pop %v509
    %v511 = vmul.f32 %v499, %v510
    %v512 = vld [vmem:[%s25] sm:$0x1]
    %v514 = vlaneseq
    %v515 = vshrl.u32 %v514, 7
    %v516 = vsub.s32 0, %v515
    %v517 = vrot.slane %v512, %v516
    %v519 = vmul.f32 %v511, %v517
    %v520 = vld [vmem:[%s27] sm:$0x1]
    %v522 = vlaneseq
    %v523 = vshrl.u32 %v522, 7
    %v524 = vsub.s32 0, %v523
    %v525 = vrot.slane %v520, %v524
    %v527 = vadd.f32 %v519, %v525
    %vm528 = vcmp.ge.f32.partialorder %v527, 0.0
    %v529 = vmul.f32 %v527, 0.2
    %v530 = vsel %vm528, %v527, %v529
    %v531 = vld [vmem:[%s29] sm:$0xff]
    %v532 = vld [vmem:[%s29 + $0x8] sm:$0xff]
    %v533 = vld [vmem:[%s29 + $0x10] sm:$0xff]
    %v534 = vld [vmem:[%s29 + $0x18] sm:$0xff]
    %v535 = vld [vmem:[%s31] sm:$0x1]
    %v537 = vlaneseq
    %v538 = vshrl.u32 %v537, 7
    %v539 = vsub.s32 0, %v538
    %v540 = vrot.slane %v535, %v539
    %v543 = vsel %vm490, %v530, 0
    %545 = vmatprep.subr.mxu0 0.0
    %546 = vmatpush1.msra.mxu0 0.0
    %547 = vmatprep.subr.mxu0 0.0
    %548 = vmatpush1.msra.mxu0 0.0
    %549 = vmatprep.subr.mxu0 0.0
    %550 = vmatpush1.msra.mxu0 0.0
    %551 = vmatprep.subr.mxu0 0.0
    %552 = vmatpush1.msra.mxu0 0.0
    %553 = vmatprep.subr.mxu0 0.0
    %554 = vmatpush1.msra.mxu0 0.0
    %555 = vmatprep.subr.mxu0 0.0
    %556 = vmatpush1.msra.mxu0 0.0
    %557 = vmatprep.subr.mxu0 0.0
    %558 = vmatpush1.msra.mxu0 0.0
    %559 = vmatprep.subr.mxu0 0.0
    %560 = vmatpush1.msra.mxu0 0.0
    %561 = vmatprep.subr.mxu0 0.0
    %562 = vmatpush1.msra.mxu0 0.0
    %563 = vmatprep.subr.mxu0 0.0
    %564 = vmatpush1.msra.mxu0 0.0
    %565 = vmatprep.subr.mxu0 0.0
    %566 = vmatpush1.msra.mxu0 0.0
    %567 = vmatprep.subr.mxu0 0.0
    %568 = vmatpush1.msra.mxu0 0.0
    %569 = vmatprep.subr.mxu0 0.0
    %570 = vmatpush1.msra.mxu0 %v534
    %571 = vmatprep.subr.mxu0 0.0
    %572 = vmatpush1.msra.mxu0 %v533
    %573 = vmatprep.subr.mxu0 0.0
    %574 = vmatpush1.msra.mxu0 %v532
    %575 = vmatprep.subr.mxu0 0.0
    %576 = vmatpush1.msra.mxu0 %v531
    %577 = vmatprep.subr.mxu0 0.0
    %578 = vmatpush2.msra.mxu0 0.0
    %579 = vmatprep.subr.mxu0 0.0
    %580 = vmatpush2.msra.mxu0 0.0
    %581 = vmatprep.subr.mxu0 0.0
    %582 = vmatpush2.msra.mxu0 0.0
    %583 = vmatprep.subr.mxu0 0.0
    %584 = vmatpush2.msra.mxu0 0.0
    %585 = vmatprep.subr.mxu0 0.0
    %586 = vmatpush2.msra.mxu0 0.0
    %587 = vmatprep.subr.mxu0 0.0
    %588 = vmatpush2.msra.mxu0 0.0
    %589 = vmatprep.subr.mxu0 0.0
    %590 = vmatpush2.msra.mxu0 0.0
    %591 = vmatprep.subr.mxu0 0.0
    %592 = vmatpush2.msra.mxu0 0.0
    %593 = vmatprep.subr.mxu0 0.0
    %594 = vmatpush2.msra.mxu0 0.0
    %595 = vmatprep.subr.mxu0 0.0
    %596 = vmatpush2.msra.mxu0 0.0
    %597 = vmatprep.subr.mxu0 0.0
    %598 = vmatpush2.msra.mxu0 0.0
    %599 = vmatprep.subr.mxu0 0.0
    %600 = vmatpush2.msra.mxu0 0.0
    %601 = vmatprep.subr.mxu0 0.0
    %602 = vmatpush2.msra.mxu0 0.0
    %603 = vmatprep.subr.mxu0 0.0
    %604 = vmatpush2.msra.mxu0 0.0
    %605 = vmatprep.subr.mxu0 0.0
    %606 = vmatpush2.msra.mxu0 0.0
    %607 = vmatprep.subr.mxu0 0.0
    %608 = vmatpush2.msra.mxu0 0.0
    %609 = vmatprep.mubr.f32.mxu0 0.0
    %610 = vmatmul.mubr.f32.gmra.mxu0 %v543
    %v611 = vpop.f32.mrf.mxu0
    %v612 = vadd.f32 %v540, %v611
    %v613 = vpop.f32.mrf.mxu0
    %614 = vdwg.mxu0
    %v615 = vld [vmem:[%s33] sm:$0xff]
    %v616 = vld [vmem:[%s33 + $0x8] sm:$0xff]
    %v617 = vld [vmem:[%s33 + $0x10] sm:$0xff]
    %v618 = vld [vmem:[%s33 + $0x18] sm:$0xff]
    %v619 = vld [vmem:[%s35] sm:$0x1]
    %v621 = vlaneseq
    %v622 = vshrl.u32 %v621, 7
    %v623 = vsub.s32 0, %v622
    %v624 = vrot.slane %v619, %v623
    %626 = vmatprep.subr.mxu0 0.0
    %627 = vmatpush1.msra.mxu0 0.0
    %628 = vmatprep.subr.mxu0 0.0
    %629 = vmatpush1.msra.mxu0 0.0
    %630 = vmatprep.subr.mxu0 0.0
    %631 = vmatpush1.msra.mxu0 0.0
    %632 = vmatprep.subr.mxu0 0.0
    %633 = vmatpush1.msra.mxu0 0.0
    %634 = vmatprep.subr.mxu0 0.0
    %635 = vmatpush1.msra.mxu0 0.0
    %636 = vmatprep.subr.mxu0 0.0
    %637 = vmatpush1.msra.mxu0 0.0
    %638 = vmatprep.subr.mxu0 0.0
    %639 = vmatpush1.msra.mxu0 0.0
    %640 = vmatprep.subr.mxu0 0.0
    %641 = vmatpush1.msra.mxu0 0.0
    %642 = vmatprep.subr.mxu0 0.0
    %643 = vmatpush1.msra.mxu0 0.0
    %644 = vmatprep.subr.mxu0 0.0
    %645 = vmatpush1.msra.mxu0 0.0
    %646 = vmatprep.subr.mxu0 0.0
    %647 = vmatpush1.msra.mxu0 0.0
    %648 = vmatprep.subr.mxu0 0.0
    %649 = vmatpush1.msra.mxu0 0.0
    %650 = vmatprep.subr.mxu0 0.0
    %651 = vmatpush1.msra.mxu0 %v618
    %652 = vmatprep.subr.mxu0 0.0
    %653 = vmatpush1.msra.mxu0 %v617
    %654 = vmatprep.subr.mxu0 0.0
    %655 = vmatpush1.msra.mxu0 %v616
    %656 = vmatprep.subr.mxu0 0.0
    %657 = vmatpush1.msra.mxu0 %v615
    %658 = vmatprep.subr.mxu0 0.0
    %659 = vmatpush2.msra.mxu0 0.0
    %660 = vmatprep.subr.mxu0 0.0
    %661 = vmatpush2.msra.mxu0 0.0
    %662 = vmatprep.subr.mxu0 0.0
    %663 = vmatpush2.msra.mxu0 0.0
    %664 = vmatprep.subr.mxu0 0.0
    %665 = vmatpush2.msra.mxu0 0.0
    %666 = vmatprep.subr.mxu0 0.0
    %667 = vmatpush2.msra.mxu0 0.0
    %668 = vmatprep.subr.mxu0 0.0
    %669 = vmatpush2.msra.mxu0 0.0
    %670 = vmatprep.subr.mxu0 0.0
    %671 = vmatpush2.msra.mxu0 0.0
    %672 = vmatprep.subr.mxu0 0.0
    %673 = vmatpush2.msra.mxu0 0.0
    %674 = vmatprep.subr.mxu0 0.0
    %675 = vmatpush2.msra.mxu0 0.0
    %676 = vmatprep.subr.mxu0 0.0
    %677 = vmatpush2.msra.mxu0 0.0
    %678 = vmatprep.subr.mxu0 0.0
    %679 = vmatpush2.msra.mxu0 0.0
    %680 = vmatprep.subr.mxu0 0.0
    %681 = vmatpush2.msra.mxu0 0.0
    %682 = vmatprep.subr.mxu0 0.0
    %683 = vmatpush2.msra.mxu0 0.0
    %684 = vmatprep.subr.mxu0 0.0
    %685 = vmatpush2.msra.mxu0 0.0
    %686 = vmatprep.subr.mxu0 0.0
    %687 = vmatpush2.msra.mxu0 0.0
    %688 = vmatprep.subr.mxu0 0.0
    %689 = vmatpush2.msra.mxu0 0.0
    %690 = vmatprep.mubr.f32.mxu0 0.0
    %691 = vmatmul.mubr.f32.gmra.mxu0 %v543
    %v692 = vpop.f32.mrf.mxu0
    %v693 = vadd.f32 %v624, %v692
    %v694 = vpop.f32.mrf.mxu0
    %695 = vdwg.mxu0
    %v696 = vld [vmem:[%s3] sm:$0xff]
    %v697 = vmul.f32 %v693, 0.5
    %v698 = vmul.f32 %v697, 1.442695
    %v699 = vpow.pop %v698
    %v700 = vmul.f32 %v696, %v699
    %v701 = vadd.f32 %v700, %v612
    %v702 = vld [vmem:[%s37] sm:$0xff]
    %v703 = vld [vmem:[%s37 + $0x8] sm:$0xff]
    %v704 = vld [vmem:[%s39] sm:$0x1]
    %v706 = vlaneseq
    %v707 = vshrl.u32 %v706, 7
    %v708 = vsub.s32 0, %v707
    %v709 = vrot.slane %v704, %v708
    %vm711 = vcmask 130048
    %v713 = vsel %vm711, %v701, 0
    %715 = vmatprep.subr.mxu0 0.0
    %716 = vmatpush1.msra.mxu0 0.0
    %717 = vmatprep.subr.mxu0 0.0
    %718 = vmatpush1.msra.mxu0 0.0
    %719 = vmatprep.subr.mxu0 0.0
    %720 = vmatpush1.msra.mxu0 0.0
    %721 = vmatprep.subr.mxu0 0.0
    %722 = vmatpush1.msra.mxu0 0.0
    %723 = vmatprep.subr.mxu0 0.0
    %724 = vmatpush1.msra.mxu0 0.0
    %725 = vmatprep.subr.mxu0 0.0
    %726 = vmatpush1.msra.mxu0 0.0
    %727 = vmatprep.subr.mxu0 0.0
    %728 = vmatpush1.msra.mxu0 0.0
    %729 = vmatprep.subr.mxu0 0.0
    %730 = vmatpush1.msra.mxu0 0.0
    %731 = vmatprep.subr.mxu0 0.0
    %732 = vmatpush1.msra.mxu0 0.0
    %733 = vmatprep.subr.mxu0 0.0
    %734 = vmatpush1.msra.mxu0 0.0
    %735 = vmatprep.subr.mxu0 0.0
    %736 = vmatpush1.msra.mxu0 0.0
    %737 = vmatprep.subr.mxu0 0.0
    %738 = vmatpush1.msra.mxu0 0.0
    %739 = vmatprep.subr.mxu0 0.0
    %740 = vmatpush1.msra.mxu0 0.0
    %741 = vmatprep.subr.mxu0 0.0
    %742 = vmatpush1.msra.mxu0 0.0
    %743 = vmatprep.subr.mxu0 0.0
    %744 = vmatpush1.msra.mxu0 %v703
    %745 = vmatprep.subr.mxu0 0.0
    %746 = vmatpush1.msra.mxu0 %v702
    %747 = vmatprep.subr.mxu0 0.0
    %748 = vmatpush2.msra.mxu0 0.0
    %749 = vmatprep.subr.mxu0 0.0
    %750 = vmatpush2.msra.mxu0 0.0
    %751 = vmatprep.subr.mxu0 0.0
    %752 = vmatpush2.msra.mxu0 0.0
    %753 = vmatprep.subr.mxu0 0.0
    %754 = vmatpush2.msra.mxu0 0.0
    %755 = vmatprep.subr.mxu0 0.0
    %756 = vmatpush2.msra.mxu0 0.0
    %757 = vmatprep.subr.mxu0 0.0
    %758 = vmatpush2.msra.mxu0 0.0
    %759 = vmatprep.subr.mxu0 0.0
    %760 = vmatpush2.msra.mxu0 0.0
    %761 = vmatprep.subr.mxu0 0.0
    %762 = vmatpush2.msra.mxu0 0.0
    %763 = vmatprep.subr.mxu0 0.0
    %764 = vmatpush2.msra.mxu0 0.0
    %765 = vmatprep.subr.mxu0 0.0
    %766 = vmatpush2.msra.mxu0 0.0
    %767 = vmatprep.subr.mxu0 0.0
    %768 = vmatpush2.msra.mxu0 0.0
    %769 = vmatprep.subr.mxu0 0.0
    %770 = vmatpush2.msra.mxu0 0.0
    %771 = vmatprep.subr.mxu0 0.0
    %772 = vmatpush2.msra.mxu0 0.0
    %773 = vmatprep.subr.mxu0 0.0
    %774 = vmatpush2.msra.mxu0 0.0
    %775 = vmatprep.subr.mxu0 0.0
    %776 = vmatpush2.msra.mxu0 0.0
    %777 = vmatprep.subr.mxu0 0.0
    %778 = vmatpush2.msra.mxu0 0.0
    %779 = vmatprep.mubr.f32.mxu0 0.0
    %780 = vmatmul.mubr.f32.gmra.mxu0 %v713
    %v781 = vpop.f32.mrf.mxu0
    %v782 = vadd.f32 %v709, %v781
    %v783 = vpop.f32.mrf.mxu0
    %784 = vdwg.mxu0
    %v785 = vsel %vm490, %v782, 0.0
    %v786 = vrot.slane %v785, 4
    %v787 = vadd.f32 %v785, %v786
    %v788 = vrot.slane %v787, 2
    %v789 = vadd.f32 %v787, %v788
    %v790 = vrot.slane %v789, 1
    %v791 = vadd.f32 %v789, %v790
    %v792 = vmul.f32 %v791, %v241
    %v793 = vsub.f32 %v782, %v792
    %v794 = vmul.f32 %v793, %v793
    %v795 = vsel %vm490, %v794, 0.0
    %v796 = vrot.slane %v795, 4
    %v797 = vadd.f32 %v795, %v796
    %v798 = vrot.slane %v797, 2
    %v799 = vadd.f32 %v797, %v798
    %v800 = vrot.slane %v799, 1
    %v801 = vadd.f32 %v799, %v800
    %v802 = vmul.f32 %v801, %v241
    %v803 = vadd.f32 %v802, 1e-05
    %v804 = vrsqrt.pop %v803
    %v805 = vmul.f32 %v793, %v804
    %v806 = vld [vmem:[%s41] sm:$0x1]
    %v808 = vlaneseq
    %v809 = vshrl.u32 %v808, 7
    %v810 = vsub.s32 0, %v809
    %v811 = vrot.slane %v806, %v810
    %v813 = vmul.f32 %v805, %v811
    %v814 = vld [vmem:[%s43] sm:$0x1]
    %v816 = vlaneseq
    %v817 = vshrl.u32 %v816, 7
    %v818 = vsub.s32 0, %v817
    %v819 = vrot.slane %v814, %v818
    %v821 = vadd.f32 %v813, %v819
    %vm822 = vcmp.ge.f32.partialorder %v821, 0.0
    %v823 = vmul.f32 %v821, 0.2
    %v824 = vsel %vm822, %v821, %v823
    %v825 = vld [vmem:[%s45] sm:$0xff]
    %v826 = vld [vmem:[%s45 + $0x8] sm:$0xff]
    %v827 = vld [vmem:[%s45 + $0x10] sm:$0xff]
    %v828 = vld [vmem:[%s45 + $0x18] sm:$0xff]
    %v829 = vld [vmem:[%s47] sm:$0x1]
    %v831 = vlaneseq
    %v832 = vshrl.u32 %v831, 7
    %v833 = vsub.s32 0, %v832
    %v834 = vrot.slane %v829, %v833
    %v837 = vsel %vm490, %v824, 0
    %839 = vmatprep.subr.mxu0 0.0
    %840 = vmatpush1.msra.mxu0 0.0
    %841 = vmatprep.subr.mxu0 0.0
    %842 = vmatpush1.msra.mxu0 0.0
    %843 = vmatprep.subr.mxu0 0.0
    %844 = vmatpush1.msra.mxu0 0.0
    %845 = vmatprep.subr.mxu0 0.0
    %846 = vmatpush1.msra.mxu0 0.0
    %847 = vmatprep.subr.mxu0 0.0
    %848 = vmatpush1.msra.mxu0 0.0
    %849 = vmatprep.subr.mxu0 0.0
    %850 = vmatpush1.msra.mxu0 0.0
    %851 = vmatprep.subr.mxu0 0.0
    %852 = vmatpush1.msra.mxu0 0.0
    %853 = vmatprep.subr.mxu0 0.0
    %854 = vmatpush1.msra.mxu0 0.0
    %855 = vmatprep.subr.mxu0 0.0
    %856 = vmatpush1.msra.mxu0 0.0
    %857 = vmatprep.subr.mxu0 0.0
    %858 = vmatpush1.msra.mxu0 0.0
    %859 = vmatprep.subr.mxu0 0.0
    %860 = vmatpush1.msra.mxu0 0.0
    %861 = vmatprep.subr.mxu0 0.0
    %862 = vmatpush1.msra.mxu0 0.0
    %863 = vmatprep.subr.mxu0 0.0
    %864 = vmatpush1.msra.mxu0 %v828
    %865 = vmatprep.subr.mxu0 0.0
    %866 = vmatpush1.msra.mxu0 %v827
    %867 = vmatprep.subr.mxu0 0.0
    %868 = vmatpush1.msra.mxu0 %v826
    %869 = vmatprep.subr.mxu0 0.0
    %870 = vmatpush1.msra.mxu0 %v825
    %871 = vmatprep.subr.mxu0 0.0
    %872 = vmatpush2.msra.mxu0 0.0
    %873 = vmatprep.subr.mxu0 0.0
    %874 = vmatpush2.msra.mxu0 0.0
    %875 = vmatprep.subr.mxu0 0.0
    %876 = vmatpush2.msra.mxu0 0.0
    %877 = vmatprep.subr.mxu0 0.0
    %878 = vmatpush2.msra.mxu0 0.0
    %879 = vmatprep.subr.mxu0 0.0
    %880 = vmatpush2.msra.mxu0 0.0
    %881 = vmatprep.subr.mxu0 0.0
    %882 = vmatpush2.msra.mxu0 0.0
    %883 = vmatprep.subr.mxu0 0.0
    %884 = vmatpush2.msra.mxu0 0.0
    %885 = vmatprep.subr.mxu0 0.0
    %886 = vmatpush2.msra.mxu0 0.0
    %887 = vmatprep.subr.mxu0 0.0
    %888 = vmatpush2.msra.mxu0 0.0
    %889 = vmatprep.subr.mxu0 0.0
    %890 = vmatpush2.msra.mxu0 0.0
    %891 = vmatprep.subr.mxu0 0.0
    %892 = vmatpush2.msra.mxu0 0.0
    %893 = vmatprep.subr.mxu0 0.0
    %894 = vmatpush2.msra.mxu0 0.0
    %895 = vmatprep.subr.mxu0 0.0
    %896 = vmatpush2.msra.mxu0 0.0
    %897 = vmatprep.subr.mxu0 0.0
    %898 = vmatpush2.msra.mxu0 0.0
    %899 = vmatprep.subr.mxu0 0.0
    %900 = vmatpush2.msra.mxu0 0.0
    %901 = vmatprep.subr.mxu0 0.0
    %902 = vmatpush2.msra.mxu0 0.0
    %903 = vmatprep.mubr.f32.mxu0 0.0
    %904 = vmatmul.mubr.f32.gmra.mxu0 %v837
    %v905 = vpop.f32.mrf.mxu0
    %v906 = vadd.f32 %v834, %v905
    %v907 = vpop.f32.mrf.mxu0
    %908 = vdwg.mxu0
    %v909 = vsel %vm363, %v906, 0.0
    %v910 = vrot.slane %v909, 4
    %v911 = vadd.f32 %v909, %v910
    %v912 = vrot.slane %v911, 2
    %v913 = vadd.f32 %v911, %v912
    %v914 = vrot.slane %v913, 1
    %v915 = vadd.f32 %v913, %v914
    %v916 = vmul.f32 %v915, %v241
    %v917 = vsub.f32 %v906, %v916
    %v918 = vmul.f32 %v917, %v917
    %v919 = vsel %vm363, %v918, 0.0
    %v920 = vrot.slane %v919, 4
    %v921 = vadd.f32 %v919, %v920
    %v922 = vrot.slane %v921, 2
    %v923 = vadd.f32 %v921, %v922
    %v924 = vrot.slane %v923, 1
    %v925 = vadd.f32 %v923, %v924
    %v926 = vmul.f32 %v925, %v241
    %v927 = vadd.f32 %v926, 1e-05
    %v928 = vrsqrt.pop %v927
    %v929 = vmul.f32 %v917, %v928
    %v930 = vld [vmem:[%s49] sm:$0x1]
    %v932 = vlaneseq
    %v933 = vshrl.u32 %v932, 7
    %v934 = vsub.s32 0, %v933
    %v935 = vrot.slane %v930, %v934
    %v937 = vmul.f32 %v929, %v935
    %v938 = vld [vmem:[%s51] sm:$0x1]
    %v940 = vlaneseq
    %v941 = vshrl.u32 %v940, 7
    %v942 = vsub.s32 0, %v941
    %v943 = vrot.slane %v938, %v942
    %v945 = vadd.f32 %v937, %v943
    %vm946 = vcmp.ge.f32.partialorder %v945, 0.0
    %v947 = vmul.f32 %v945, 0.2
    %v948 = vsel %vm946, %v945, %v947
    %v949 = vld [vmem:[%s53] sm:$0xff]
    %v950 = vld [vmem:[%s53 + $0x8] sm:$0xff]
    %v951 = vld [vmem:[%s53 + $0x10] sm:$0xff]
    %v952 = vld [vmem:[%s53 + $0x18] sm:$0xff]
    %v953 = vld [vmem:[%s53 + $0x20] sm:$0xff]
    %v954 = vld [vmem:[%s53 + $0x28] sm:$0xff]
    %v955 = vld [vmem:[%s55] sm:$0x1]
    %v957 = vlaneseq
    %v958 = vshrl.u32 %v957, 7
    %v959 = vsub.s32 0, %v958
    %v960 = vrot.slane %v955, %v959
    %v963 = vsel %vm363, %v948, 0
    %965 = vmatprep.subr.mxu0 0.0
    %966 = vmatpush1.msra.mxu0 0.0
    %967 = vmatprep.subr.mxu0 0.0
    %968 = vmatpush1.msra.mxu0 0.0
    %969 = vmatprep.subr.mxu0 0.0
    %970 = vmatpush1.msra.mxu0 0.0
    %971 = vmatprep.subr.mxu0 0.0
    %972 = vmatpush1.msra.mxu0 0.0
    %973 = vmatprep.subr.mxu0 0.0
    %974 = vmatpush1.msra.mxu0 0.0
    %975 = vmatprep.subr.mxu0 0.0
    %976 = vmatpush1.msra.mxu0 0.0
    %977 = vmatprep.subr.mxu0 0.0
    %978 = vmatpush1.msra.mxu0 0.0
    %979 = vmatprep.subr.mxu0 0.0
    %980 = vmatpush1.msra.mxu0 0.0
    %981 = vmatprep.subr.mxu0 0.0
    %982 = vmatpush1.msra.mxu0 0.0
    %983 = vmatprep.subr.mxu0 0.0
    %984 = vmatpush1.msra.mxu0 0.0
    %985 = vmatprep.subr.mxu0 0.0
    %986 = vmatpush1.msra.mxu0 %v954
    %987 = vmatprep.subr.mxu0 0.0
    %988 = vmatpush1.msra.mxu0 %v953
    %989 = vmatprep.subr.mxu0 0.0
    %990 = vmatpush1.msra.mxu0 %v952
    %991 = vmatprep.subr.mxu0 0.0
    %992 = vmatpush1.msra.mxu0 %v951
    %993 = vmatprep.subr.mxu0 0.0
    %994 = vmatpush1.msra.mxu0 %v950
    %995 = vmatprep.subr.mxu0 0.0
    %996 = vmatpush1.msra.mxu0 %v949
    %997 = vmatprep.subr.mxu0 0.0
    %998 = vmatpush2.msra.mxu0 0.0
    %999 = vmatprep.subr.mxu0 0.0
    %1000 = vmatpush2.msra.mxu0 0.0
    %1001 = vmatprep.subr.mxu0 0.0
    %1002 = vmatpush2.msra.mxu0 0.0
    %1003 = vmatprep.subr.mxu0 0.0
    %1004 = vmatpush2.msra.mxu0 0.0
    %1005 = vmatprep.subr.mxu0 0.0
    %1006 = vmatpush2.msra.mxu0 0.0
    %1007 = vmatprep.subr.mxu0 0.0
    %1008 = vmatpush2.msra.mxu0 0.0
    %1009 = vmatprep.subr.mxu0 0.0
    %1010 = vmatpush2.msra.mxu0 0.0
    %1011 = vmatprep.subr.mxu0 0.0
    %1012 = vmatpush2.msra.mxu0 0.0
    %1013 = vmatprep.subr.mxu0 0.0
    %1014 = vmatpush2.msra.mxu0 0.0
    %1015 = vmatprep.subr.mxu0 0.0
    %1016 = vmatpush2.msra.mxu0 0.0
    %1017 = vmatprep.subr.mxu0 0.0
    %1018 = vmatpush2.msra.mxu0 0.0
    %1019 = vmatprep.subr.mxu0 0.0
    %1020 = vmatpush2.msra.mxu0 0.0
    %1021 = vmatprep.subr.mxu0 0.0
    %1022 = vmatpush2.msra.mxu0 0.0
    %1023 = vmatprep.subr.mxu0 0.0
    %1024 = vmatpush2.msra.mxu0 0.0
    %1025 = vmatprep.subr.mxu0 0.0
    %1026 = vmatpush2.msra.mxu0 0.0
    %1027 = vmatprep.subr.mxu0 0.0
    %1028 = vmatpush2.msra.mxu0 0.0
    %1029 = vmatprep.mubr.f32.mxu0 0.0
    %1030 = vmatmul.mubr.f32.gmra.mxu0 %v963
    %v1031 = vpop.f32.mrf.mxu0
    %v1032 = vadd.f32 %v960, %v1031
    %v1033 = vpop.f32.mrf.mxu0
    %1034 = vdwg.mxu0
    %v1035 = vsel %vm160, %v1032, 0.0
    %v1036 = vrot.slane %v1035, 4
    %v1037 = vadd.f32 %v1035, %v1036
    %v1038 = vrot.slane %v1037, 2
    %v1039 = vadd.f32 %v1037, %v1038
    %v1040 = vrot.slane %v1039, 1
    %v1041 = vadd.f32 %v1039, %v1040
    %v1042 = vmul.f32 %v1041, %v241
    %v1043 = vsub.f32 %v1032, %v1042
    %v1044 = vmul.f32 %v1043, %v1043
    %v1045 = vsel %vm160, %v1044, 0.0
    %v1046 = vrot.slane %v1045, 4
    %v1047 = vadd.f32 %v1045, %v1046
    %v1048 = vrot.slane %v1047, 2
    %v1049 = vadd.f32 %v1047, %v1048
    %v1050 = vrot.slane %v1049, 1
    %v1051 = vadd.f32 %v1049, %v1050
    %v1052 = vmul.f32 %v1051, %v241
    %v1053 = vadd.f32 %v1052, 1e-05
    %v1054 = vrsqrt.pop %v1053
    %v1055 = vmul.f32 %v1043, %v1054
    %v1056 = vld [vmem:[%s57] sm:$0x1]
    %v1058 = vlaneseq
    %v1059 = vshrl.u32 %v1058, 7
    %v1060 = vsub.s32 0, %v1059
    %v1061 = vrot.slane %v1056, %v1060
    %v1063 = vmul.f32 %v1055, %v1061
    %v1064 = vld [vmem:[%s59] sm:$0x1]
    %v1066 = vlaneseq
    %v1067 = vshrl.u32 %v1066, 7
    %v1068 = vsub.s32 0, %v1067
    %v1069 = vrot.slane %v1064, %v1068
    %v1071 = vadd.f32 %v1063, %v1069
    %vm1072 = vcmp.ge.f32.partialorder %v1071, 0.0
    %v1073 = vmul.f32 %v1071, 0.2
    %v1074 = vsel %vm1072, %v1071, %v1073
    %v1075 = vld [vmem:[%s61] sm:$0xff]
    %v1076 = vld [vmem:[%s61 + $0x8] sm:$0xff]
    %v1077 = vld [vmem:[%s61 + $0x10] sm:$0xff]
    %v1078 = vld [vmem:[%s61 + $0x18] sm:$0xff]
    %v1079 = vld [vmem:[%s61 + $0x20] sm:$0xff]
    %v1080 = vld [vmem:[%s61 + $0x28] sm:$0xff]
    %v1081 = vld [vmem:[%s61 + $0x30] sm:$0xff]
    %v1082 = vld [vmem:[%s61 + $0x38] sm:$0xff]
    %v1083 = vld [vmem:[%s63] sm:$0x1]
    %v1085 = vlaneseq
    %v1086 = vshrl.u32 %v1085, 7
    %v1087 = vsub.s32 0, %v1086
    %v1088 = vrot.slane %v1083, %v1087
    %v1091 = vsel %vm160, %v1074, 0
    %1093 = vmatprep.subr.mxu0 0.0
    %1094 = vmatpush1.msra.mxu0 0.0
    %1095 = vmatprep.subr.mxu0 0.0
    %1096 = vmatpush1.msra.mxu0 0.0
    %1097 = vmatprep.subr.mxu0 0.0
    %1098 = vmatpush1.msra.mxu0 0.0
    %1099 = vmatprep.subr.mxu0 0.0
    %1100 = vmatpush1.msra.mxu0 0.0
    %1101 = vmatprep.subr.mxu0 0.0
    %1102 = vmatpush1.msra.mxu0 0.0
    %1103 = vmatprep.subr.mxu0 0.0
    %1104 = vmatpush1.msra.mxu0 0.0
    %1105 = vmatprep.subr.mxu0 0.0
    %1106 = vmatpush1.msra.mxu0 0.0
    %1107 = vmatprep.subr.mxu0 0.0
    %1108 = vmatpush1.msra.mxu0 0.0
    %1109 = vmatprep.subr.mxu0 0.0
    %1110 = vmatpush1.msra.mxu0 %v1082
    %1111 = vmatprep.subr.mxu0 0.0
    %1112 = vmatpush1.msra.mxu0 %v1081
    %1113 = vmatprep.subr.mxu0 0.0
    %1114 = vmatpush1.msra.mxu0 %v1080
    %1115 = vmatprep.subr.mxu0 0.0
    %1116 = vmatpush1.msra.mxu0 %v1079
    %1117 = vmatprep.subr.mxu0 0.0
    %1118 = vmatpush1.msra.mxu0 %v1078
    %1119 = vmatprep.subr.mxu0 0.0
    %1120 = vmatpush1.msra.mxu0 %v1077
    %1121 = vmatprep.subr.mxu0 0.0
    %1122 = vmatpush1.msra.mxu0 %v1076
    %1123 = vmatprep.subr.mxu0 0.0
    %1124 = vmatpush1.msra.mxu0 %v1075
    %1125 = vmatprep.subr.mxu0 0.0
    %1126 = vmatpush2.msra.mxu0 0.0
    %1127 = vmatprep.subr.mxu0 0.0
    %1128 = vmatpush2.msra.mxu0 0.0
    %1129 = vmatprep.subr.mxu0 0.0
    %1130 = vmatpush2.msra.mxu0 0.0
    %1131 = vmatprep.subr.mxu0 0.0
    %1132 = vmatpush2.msra.mxu0 0.0
    %1133 = vmatprep.subr.mxu0 0.0
    %1134 = vmatpush2.msra.mxu0 0.0
    %1135 = vmatprep.subr.mxu0 0.0
    %1136 = vmatpush2.msra.mxu0 0.0
    %1137 = vmatprep.subr.mxu0 0.0
    %1138 = vmatpush2.msra.mxu0 0.0
    %1139 = vmatprep.subr.mxu0 0.0
    %1140 = vmatpush2.msra.mxu0 0.0
    %1141 = vmatprep.subr.mxu0 0.0
    %1142 = vmatpush2.msra.mxu0 0.0
    %1143 = vmatprep.subr.mxu0 0.0
    %1144 = vmatpush2.msra.mxu0 0.0
    %1145 = vmatprep.subr.mxu0 0.0
    %1146 = vmatpush2.msra.mxu0 0.0
    %1147 = vmatprep.subr.mxu0 0.0
    %1148 = vmatpush2.msra.mxu0 0.0
    %1149 = vmatprep.subr.mxu0 0.0
    %1150 = vmatpush2.msra.mxu0 0.0
    %1151 = vmatprep.subr.mxu0 0.0
    %1152 = vmatpush2.msra.mxu0 0.0
    %1153 = vmatprep.subr.mxu0 0.0
    %1154 = vmatpush2.msra.mxu0 0.0
    %1155 = vmatprep.subr.mxu0 0.0
    %1156 = vmatpush2.msra.mxu0 0.0
    %1157 = vmatprep.mubr.f32.mxu0 0.0
    %1158 = vmatmul.mubr.f32.gmra.mxu0 %v1091
    %v1159 = vpop.f32.mrf.mxu0
    %v1160 = vadd.f32 %v1088, %v1159
    %v1161 = vpop.f32.mrf.mxu0
    %1162 = vdwg.mxu0
    %1163 = vst.msk [vmem:[#allocation2] sm:$0xff] %vm711, %v701
    %1164 = vst.msk [vmem:[#allocation4] sm:$0xff] %vm363, %v1160
    %1165 = vst.msk [vmem:[#allocation6] sm:$0xff] %vm711, %v612
    %1166 = vst.msk [vmem:[#allocation7] sm:$0xff] %vm711, %v693
    // Predicated region
    $region130: #{tpu_custom_call.1} parent=1 // pred_check
      _
    $region131: #{tpu_custom_call.1} parent=1 // pred_check_branch
      %1168 = sbr.rel (0) target = $region133
    $region132: #{tpu_custom_call.1} parent=1 // pred_region
      %s1170 = ssub.s32 128, 128
      %1171 = vsyncadd [#allocation3], %s1170
      %s1173 = sshll.u32 [#allocation2], 4
      %s1174 = int_to_ptr.vmem [resolvable:$true] %s1173
      %1176 = dma.vmem_to_hbm [thread:$0]  %s1174, 128, %s65, [#allocation3]
    $region133: #{tpu_custom_call.1} parent=1 // pred_fallthru
      _
    // Predicated region
    $region134: #{tpu_custom_call.1} parent=1 // pred_check
      _
    $region135: #{tpu_custom_call.1} parent=1 // pred_check_branch
      %1178 = sbr.rel (0) target = $region137
    $region136: #{tpu_custom_call.1} parent=1 // pred_region
      %s1180 = ssub.s32 128, 128
      %1181 = vsyncadd [#allocation5], %s1180
      %s1183 = sshll.u32 [#allocation4], 4
      %s1184 = int_to_ptr.vmem [resolvable:$true] %s1183
      %1186 = dma.vmem_to_hbm [thread:$0]  %s1184, 128, %s67, [#allocation5]
    $region137: #{tpu_custom_call.1} parent=1 // pred_fallthru
      _
    // Predicated region
    $region138: #{tpu_custom_call.1} parent=1 // pred_check
      _
    $region139: #{tpu_custom_call.1} parent=1 // pred_check_branch
      %1188 = sbr.rel (0) target = $region141
    $region140: #{tpu_custom_call.1} parent=1 // pred_region
      %s1190 = ssub.s32 128, 128
      %1191 = vsyncadd [#allocation5], %s1190
      %s1193 = sshll.u32 [#allocation6], 4
      %s1194 = int_to_ptr.vmem [resolvable:$true] %s1193
      %1196 = dma.vmem_to_hbm [thread:$0]  %s1194, 128, %s69, [#allocation5]
    $region141: #{tpu_custom_call.1} parent=1 // pred_fallthru
      _
    // Predicated region
    $region142: #{tpu_custom_call.1} parent=1 // pred_check
      _
    $region143: #{tpu_custom_call.1} parent=1 // pred_check_branch
      %1198 = sbr.rel (0) target = $region145
    $region144: #{tpu_custom_call.1} parent=1 // pred_region
      %s1200 = ssub.s32 128, 128
      %1201 = vsyncadd [#allocation8], %s1200
      %s1203 = sshll.u32 [#allocation7], 4
      %s1204 = int_to_ptr.vmem [resolvable:$true] %s1203
      %1206 = dma.vmem_to_hbm [thread:$0]  %s1204, 128, %s71, [#allocation8]
    $region145: #{tpu_custom_call.1} parent=1 // pred_fallthru
      _
    // Predicated region
    $region146: #{tpu_custom_call.1} parent=1 // pred_check
      _
    $region147: #{tpu_custom_call.1} parent=1 // pred_check_branch
      %1208 = sbr.rel (0) target = $region149
    $region148: #{tpu_custom_call.1} parent=1 // pred_region
      %1209 = dma.done [#allocation3], 128
    $region149: #{tpu_custom_call.1} parent=1 // pred_fallthru
      _
    // Predicated region
    $region150: #{tpu_custom_call.1} parent=1 // pred_check
      _
    $region151: #{tpu_custom_call.1} parent=1 // pred_check_branch
      %1211 = sbr.rel (0) target = $region153
    $region152: #{tpu_custom_call.1} parent=1 // pred_region
      %1212 = dma.done [#allocation5], 128
    $region153: #{tpu_custom_call.1} parent=1 // pred_fallthru
      _
    // Predicated region
    $region154: #{tpu_custom_call.1} parent=1 // pred_check
      _
    $region155: #{tpu_custom_call.1} parent=1 // pred_check_branch
      %1214 = sbr.rel (0) target = $region157
    $region156: #{tpu_custom_call.1} parent=1 // pred_region
      %1215 = dma.done [#allocation5], 128
    $region157: #{tpu_custom_call.1} parent=1 // pred_fallthru
      _
    // Predicated region
    $region158: #{tpu_custom_call.1} parent=1 // pred_check
      _
    $region159: #{tpu_custom_call.1} parent=1 // pred_check_branch
      %1217 = sbr.rel (0) target = $region161
    $region160: #{tpu_custom_call.1} parent=1 // pred_region
      %1218 = dma.done [#allocation8], 128
    $region161: #{tpu_custom_call.1} parent=1 // pred_fallthru
      _
    %1219 = vsyncpa [#allocation3], 1
    %1220 = vsyncpa [#allocation5], 1
    %1221 = vsyncpa [#allocation8], 1

</llo_original>
